<compile_context>
chip_gen: v5e
topology: v5e:2x2
jax: 0.10.0
libtpu: 0.0.40
codegen_flags: <defaults>
</compile_context>

<pallas_src>
import jax
import jax.numpy as jnp
from jax import lax
from jax.experimental import pallas as pl
from jax.experimental.pallas import tpu as pltpu

HIDDEN = 128       # LSTM hidden size
POOL_DIM = 256     # output dim of fuse_h / fuse_c
INPUT_FEAT = 144   # LSTM input feature size
SUBLANE = 8        # f32 sublane count; batch rows are padded up to this


def _sigmoid_via_tanh(x):
    # sigmoid(x) == 0.5 + 0.5*tanh(0.5*x): exact identity, single EUP op.
    return 0.5 + 0.5 * jnp.tanh(0.5 * x)


# ---------------------------------------------------------------------------
# Single fused kernel: input projection + LSTM recurrence + fuse_h/fuse_c
# ---------------------------------------------------------------------------
def fusion_kernel(ctx_ref, pool_ref, wih_ref, whh_ref, b_ref,
                  wf_ref, bf_ref, noise_ref,
                  oh_ref, oc_ref,
                  gx_ref):
    # ctx_ref:   (S*Bp, F)  bf16, seq-major rows: row = s*Bp + b (Bp % 8 == 0)
    # pool_ref:  (Bp, H)    f32, pool[0] reshaped (rows >= B are padding)
    # wih_ref:   (F, 4H)    bf16, w_ih pre-transposed
    # whh_ref:   (H, 4H)    bf16
    # b_ref:     (1, 4H)    f32, b_ih + b_hh
    # wf_ref:    (2H, 2P)   bf16, [w_h | w_c]
    # bf_ref:    (1, 2P)    f32, [b_h | b_c]
    # noise_ref: (Bp, P)    f32
    # gx_ref:    (S*Bp, 4H) f32 VMEM scratch for the hoisted input projection
    SBp, _ = ctx_ref.shape
    Bp, H = pool_ref.shape
    S = SBp // Bp
    P = oh_ref.shape[1]

    # ---- Hoisted input projection: one big bf16 MXU matmul, f32 acc, bias --
    gx_ref[...] = (
        jnp.dot(ctx_ref[...], wih_ref[...], preferred_element_type=jnp.float32)
        + b_ref[...])

    # ---- LSTM recurrence: only h @ W_hh is on the serial critical path -----
    def step(t, carry):
        h, c = carry                                   # f32 (Bp, H) carries
        row = pl.multiple_of(t * Bp, Bp)               # Bp is a multiple of 8
        gates = gx_ref[pl.ds(row, Bp), :] + jnp.dot(   # aligned whole-tile load
            h.astype(jnp.bfloat16), whh_ref[...],
            preferred_element_type=jnp.float32)        # (Bp, 4H) f32
        # PyTorch gate order: i, f, g, o
        i = _sigmoid_via_tanh(gates[:, 0:H])
        f = _sigmoid_via_tanh(gates[:, H:2 * H])
        g = jnp.tanh(gates[:, 2 * H:3 * H])
        o = _sigmoid_via_tanh(gates[:, 3 * H:4 * H])
        c_new = f * c + i * g
        h_new = o * jnp.tanh(c_new)
        return (h_new, c_new)

    h0 = jnp.zeros((Bp, H), jnp.float32)
    c0 = jnp.zeros((Bp, H), jnp.float32)
    h_fin, _ = lax.fori_loop(0, S, step, (h0, c0), unroll=8)

    # ---- fuse_h / fuse_c as ONE (Bp, 2H) @ (2H, 2P) bf16 matmul + tanh -----
    fused = jnp.concatenate([pool_ref[...], h_fin], axis=1).astype(jnp.bfloat16)
    out = jnp.tanh(
        jnp.dot(fused, wf_ref[...], preferred_element_type=jnp.float32)
        + bf_ref[...])                                                 # (Bp, 2P)
    n = noise_ref[...]
    oh_ref[...] = n * out[:, :P]
    oc_ref[...] = n * out[:, P:2 * P]


def run_fusion(ctx2d, pool2d, w_ih, w_hh, b_lstm, w_fuse, b_fuse, noise):
    Bp, H = pool2d.shape
    SBp, F = ctx2d.shape
    S = SBp // Bp
    P = noise.shape[1]
    vmem = lambda: pl.BlockSpec(memory_space=pltpu.MemorySpace.VMEM)

    flops = (2 * S * Bp * F * 4 * H          # input projection
             + 2 * S * Bp * H * 4 * H        # recurrent matmuls
             + 2 * Bp * (2 * H) * (2 * P))   # fused linear
    transcendentals = 5 * S * Bp * H + 2 * Bp * P
    bytes_accessed = (sum(int(a.size) * a.dtype.itemsize for a in
                          (ctx2d, pool2d, w_ih, w_hh, b_lstm, w_fuse, b_fuse,
                           noise))
                      + 2 * Bp * P * 4)

    return pl.pallas_call(
        fusion_kernel,
        out_shape=(jax.ShapeDtypeStruct((Bp, P), jnp.float32),
                   jax.ShapeDtypeStruct((Bp, P), jnp.float32)),
        in_specs=[vmem()] * 8,
        out_specs=(vmem(), vmem()),
        scratch_shapes=[pltpu.VMEM((S * Bp, 4 * H), jnp.float32)],
        compiler_params=pltpu.CompilerParams(
            vmem_limit_bytes=32 * 1024 * 1024),
        cost_estimate=pl.CostEstimate(flops=flops,
                                      transcendentals=transcendentals,
                                      bytes_accessed=bytes_accessed),
    )(ctx2d, pool2d, w_ih, w_hh, b_lstm, w_fuse, b_fuse, noise)


# ---------------------------------------------------------------------------
# Fusion.forward equivalent (tiny amount of glue in plain JAX)
# ---------------------------------------------------------------------------
def fusion_forward(params, pool_h, context_feature, noise):
    # pool_h:           (1, B, HIDDEN)    == pool[0] in the PyTorch module
    # context_feature:  (B, S, 144)
    # noise:            (B, POOL_DIM)     (torch.randn_like equivalent)
    B = pool_h.shape[1]
    S = context_feature.shape[1]
    Bp = ((B + SUBLANE - 1) // SUBLANE) * SUBLANE   # pad batch to 8 sublanes

    # torch.transpose(context_feature, 1, 0) -> seq-major; pad batch rows so
    # every in-kernel per-step gates read is an aligned whole-tile load.
    ctx = jnp.transpose(context_feature, (1, 0, 2)).astype(jnp.float32)
    ctx = jnp.pad(ctx, ((0, 0), (0, Bp - B), (0, 0)))
    ctx2d = ctx.reshape(S * Bp, INPUT_FEAT).astype(jnp.bfloat16)

    pool2d = jnp.pad(pool_h.reshape(B, HIDDEN).astype(jnp.float32),
                     ((0, Bp - B), (0, 0)))
    noise_p = jnp.pad(noise.astype(jnp.float32), ((0, Bp - B), (0, 0)))

    w_fuse = jnp.concatenate([params["w_h"], params["w_c"]],
                             axis=1).astype(jnp.bfloat16)              # (2H, 2P)
    b_fuse = jnp.concatenate([params["b_h"], params["b_c"]],
                             axis=1).astype(jnp.float32)               # (1, 2P)

    oh, oc = run_fusion(ctx2d, pool2d,
                        params["w_ih"].astype(jnp.bfloat16),
                        params["w_hh"].astype(jnp.bfloat16),
                        params["b_lstm"].astype(jnp.float32),
                        w_fuse, b_fuse, noise_p)
    # Drop the padded rows; unsqueeze(0) like the PyTorch module.
    return oh[:B][None, :, :], oc[:B][None, :, :]


# Pure-JAX f32 reference (correctness sanity check)
def fusion_forward_ref(params, pool_h, context_feature, noise):
    ctx = jnp.transpose(context_feature, (1, 0, 2)).astype(jnp.float32)
    S, B, _ = ctx.shape
    h = jnp.zeros((B, HIDDEN), jnp.float32)
    c = jnp.zeros((B, HIDDEN), jnp.float32)
    for t in range(S):
        gates = ctx[t] @ params["w_ih"] + h @ params["w_hh"] + params["b_lstm"]
        i = jax.nn.sigmoid(gates[:, :HIDDEN])
        f = jax.nn.sigmoid(gates[:, HIDDEN:2 * HIDDEN])
        g = jnp.tanh(gates[:, 2 * HIDDEN:3 * HIDDEN])
        o = jax.nn.sigmoid(gates[:, 3 * HIDDEN:])
        c = f * c + i * g
        h = o * jnp.tanh(c)
    fused_in = jnp.concatenate([pool_h.reshape(-1, HIDDEN), h], axis=1)
    fh = jnp.tanh(fused_in @ params["w_h"] + params["b_h"])
    fc = jnp.tanh(fused_in @ params["w_c"] + params["b_c"])
    return (noise * fh)[None], (noise * fc)[None]


if __name__ == "__main__":
    key = jax.random.PRNGKey(0)
    ks = jax.random.split(key, 10)

    B = 2       # batch (num agents)
    S = 8       # context sequence length (small stand-in for 512)

    # Deterministic synthetic parameters (weights stored pre-transposed for
    # row-major (batch, feat) @ (feat, out) matmuls).
    params = {
        "w_ih": 0.1 * jax.random.normal(ks[0], (INPUT_FEAT, 4 * HIDDEN), jnp.float32),
        "w_hh": 0.1 * jax.random.normal(ks[1], (HIDDEN, 4 * HIDDEN), jnp.float32),
        "b_lstm": 0.1 * jax.random.normal(ks[2], (1, 4 * HIDDEN), jnp.float32),  # b_ih+b_hh
        "w_h": 0.1 * jax.random.normal(ks[3], (2 * HIDDEN, POOL_DIM), jnp.float32),
        "b_h": 0.1 * jax.random.normal(ks[4], (1, POOL_DIM), jnp.float32),
        "w_c": 0.1 * jax.random.normal(ks[5], (2 * HIDDEN, POOL_DIM), jnp.float32),
        "b_c": 0.1 * jax.random.normal(ks[6], (1, POOL_DIM), jnp.float32),
    }

    # Inputs: pool is an (h, c) style tuple — only pool[0] is used by forward.
    pool_h = jax.random.normal(ks[7], (1, B, HIDDEN), jnp.float32)
    context_feature = jax.random.normal(ks[8], (B, S, INPUT_FEAT), jnp.float32)
    # torch.randn_like(fused_features_c) — generated deterministically here.
    noise = jax.random.normal(ks[9], (B, POOL_DIM), jnp.float32)

    out_h, out_c = fusion_forward(params, pool_h, context_feature, noise)
    jax.block_until_ready((out_h, out_c))

    ref_h, ref_c = fusion_forward_ref(params, pool_h, context_feature, noise)
    assert out_h.shape == (1, B, POOL_DIM) and out_c.shape == (1, B, POOL_DIM)
    # Tolerance loosened vs. the pure-f32 version: MXU operands are bf16
    # (f32 accumulation / f32 carry), so ~1e-3-level rounding compounds
    # through the recurrence; 1e-2 comfortably bounds it at these scales.
    assert jnp.allclose(out_h, ref_h, atol=1e-2, rtol=1e-2)
    assert jnp.allclose(out_c, ref_c, atol=1e-2, rtol=1e-2)

    print("KERNEL_OK")
</pallas_src>

<mosaic_0001>
module attributes {stable_mosaic.version = 11 : i64} {
  func.func @fusion_kernel(%arg0: memref<64x144xbf16, #tpu.memory_space<vmem>>, %arg1: memref<8x128xf32, #tpu.memory_space<vmem>>, %arg2: memref<144x512xbf16, #tpu.memory_space<vmem>>, %arg3: memref<128x512xbf16, #tpu.memory_space<vmem>>, %arg4: memref<1x512xf32, #tpu.memory_space<vmem>>, %arg5: memref<256x512xbf16, #tpu.memory_space<vmem>>, %arg6: memref<1x512xf32, #tpu.memory_space<vmem>>, %arg7: memref<8x256xf32, #tpu.memory_space<vmem>>, %arg8: memref<8x256xf32, #tpu.memory_space<vmem>>, %arg9: memref<8x256xf32, #tpu.memory_space<vmem>>, %arg10: memref<64x512xf32, #tpu.memory_space<vmem>>) attributes {dimension_semantics = [], scalar_prefetch = 0 : i64, scratch_operands = 1 : i64, tpu.core_type = #tpu.core_type<tc>} {
    %c0 = arith.constant 0 : index
    %c0_0 = arith.constant 0 : index
    %0 = vector.load %arg0[%c0, %c0_0] : memref<64x144xbf16, #tpu.memory_space<vmem>>, vector<64x144xbf16>
    %c0_1 = arith.constant 0 : index
    %c0_2 = arith.constant 0 : index
    %1 = vector.load %arg2[%c0_1, %c0_2] : memref<144x512xbf16, #tpu.memory_space<vmem>>, vector<144x512xbf16>
    %cst = arith.constant dense<0.000000e+00> : vector<64x512xf32>
    %2 = tpu.matmul %0, %1, %cst {dimension_numbers = #tpu.dot_dimension_numbers<[1], [0], [0], [1], [0, 0, 1, 1], [], []>} : vector<64x144xbf16>, vector<144x512xbf16>, vector<64x512xf32> -> vector<64x512xf32>
    %c0_3 = arith.constant 0 : index
    %c0_4 = arith.constant 0 : index
    %3 = vector.load %arg4[%c0_3, %c0_4] : memref<1x512xf32, #tpu.memory_space<vmem>>, vector<1x512xf32>
    %4 = vector.broadcast %3 : vector<1x512xf32> to vector<64x512xf32>
    %5 = arith.addf %2, %4 : vector<64x512xf32>
    %c0_5 = arith.constant 0 : index
    %c0_6 = arith.constant 0 : index
    %6 = vector.load %arg10[%c0_5, %c0_6] : memref<64x512xf32, #tpu.memory_space<vmem>>, vector<64x512xf32>
    tpu.vector_store %arg10[%c0_5, %c0_6], %5 {strides = array<i32>} : memref<64x512xf32, #tpu.memory_space<vmem>>, vector<64x512xf32>,
    %cst_7 = arith.constant 0.000000e+00 : f32
    %7 = vector.broadcast %cst_7 : f32 to vector<8x128xf32>
    %cst_8 = arith.constant 0.000000e+00 : f32
    %8 = vector.broadcast %cst_8 : f32 to vector<8x128xf32>
    %c0_i32 = arith.constant 0 : i32
    %c8_i32 = arith.constant 8 : i32
    %9 = arith.muli %c0_i32, %c8_i32 : i32
    %10 = tpu.assume_multiple %9, 8 : i32
    %11 = arith.index_cast %10 : i32 to index
    %c0_9 = arith.constant 0 : index
    %12 = vector.load %arg10[%11, %c0_9] : memref<64x512xf32, #tpu.memory_space<vmem>>, vector<8x512xf32>
    %13 = arith.truncf %7 : vector<8x128xf32> to vector<8x128xbf16>
    %c0_10 = arith.constant 0 : index
    %c0_11 = arith.constant 0 : index
    %14 = vector.load %arg3[%c0_10, %c0_11] : memref<128x512xbf16, #tpu.memory_space<vmem>>, vector<128x512xbf16>
    %cst_12 = arith.constant dense<0.000000e+00> : vector<8x512xf32>
    %15 = tpu.matmul %13, %14, %cst_12 {dimension_numbers = #tpu.dot_dimension_numbers<[1], [0], [0], [1], [0, 0, 1, 1], [], []>} : vector<8x128xbf16>, vector<128x512xbf16>, vector<8x512xf32> -> vector<8x512xf32>
    %16 = arith.addf %12, %15 : vector<8x512xf32>
    %17 = vector.extract_strided_slice %16 {offsets = [0, 0], sizes = [8, 128], strides = [1, 1]} : vector<8x512xf32> to vector<8x128xf32>
    %cst_13 = arith.constant 5.000000e-01 : f32
    %18 = vector.broadcast %cst_13 : f32 to vector<8x128xf32>
    %19 = arith.mulf %18, %17 : vector<8x128xf32>
    %20 = math.tanh %19 : vector<8x128xf32>
    %cst_14 = arith.constant 5.000000e-01 : f32
    %21 = vector.broadcast %cst_14 : f32 to vector<8x128xf32>
    %22 = arith.mulf %21, %20 : vector<8x128xf32>
    %cst_15 = arith.constant 5.000000e-01 : f32
    %23 = vector.broadcast %cst_15 : f32 to vector<8x128xf32>
    %24 = arith.addf %23, %22 : vector<8x128xf32>
    %25 = vector.extract_strided_slice %16 {offsets = [0, 128], sizes = [8, 128], strides = [1, 1]} : vector<8x512xf32> to vector<8x128xf32>
    %cst_16 = arith.constant 5.000000e-01 : f32
    %26 = vector.broadcast %cst_16 : f32 to vector<8x128xf32>
    %27 = arith.mulf %26, %25 : vector<8x128xf32>
    %28 = math.tanh %27 : vector<8x128xf32>
    %cst_17 = arith.constant 5.000000e-01 : f32
    %29 = vector.broadcast %cst_17 : f32 to vector<8x128xf32>
    %30 = arith.mulf %29, %28 : vector<8x128xf32>
    %cst_18 = arith.constant 5.000000e-01 : f32
    %31 = vector.broadcast %cst_18 : f32 to vector<8x128xf32>
    %32 = arith.addf %31, %30 : vector<8x128xf32>
    %33 = vector.extract_strided_slice %16 {offsets = [0, 256], sizes = [8, 128], strides = [1, 1]} : vector<8x512xf32> to vector<8x128xf32>
    %34 = math.tanh %33 : vector<8x128xf32>
    %35 = vector.extract_strided_slice %16 {offsets = [0, 384], sizes = [8, 128], strides = [1, 1]} : vector<8x512xf32> to vector<8x128xf32>
    %cst_19 = arith.constant 5.000000e-01 : f32
    %36 = vector.broadcast %cst_19 : f32 to vector<8x128xf32>
    %37 = arith.mulf %36, %35 : vector<8x128xf32>
    %38 = math.tanh %37 : vector<8x128xf32>
    %cst_20 = arith.constant 5.000000e-01 : f32
    %39 = vector.broadcast %cst_20 : f32 to vector<8x128xf32>
    %40 = arith.mulf %39, %38 : vector<8x128xf32>
    %cst_21 = arith.constant 5.000000e-01 : f32
    %41 = vector.broadcast %cst_21 : f32 to vector<8x128xf32>
    %42 = arith.addf %41, %40 : vector<8x128xf32>
    %43 = arith.mulf %32, %8 : vector<8x128xf32>
    %44 = arith.mulf %24, %34 : vector<8x128xf32>
    %45 = arith.addf %43, %44 : vector<8x128xf32>
    %46 = math.tanh %45 : vector<8x128xf32>
    %47 = arith.mulf %42, %46 : vector<8x128xf32>
    %c1_i32 = arith.constant 1 : i32
    %c8_i32_22 = arith.constant 8 : i32
    %48 = arith.muli %c1_i32, %c8_i32_22 : i32
    %49 = tpu.assume_multiple %48, 8 : i32
    %50 = arith.index_cast %49 : i32 to index
    %c0_23 = arith.constant 0 : index
    %51 = vector.load %arg10[%50, %c0_23] : memref<64x512xf32, #tpu.memory_space<vmem>>, vector<8x512xf32>
    %52 = arith.truncf %47 : vector<8x128xf32> to vector<8x128xbf16>
    %c0_24 = arith.constant 0 : index
    %c0_25 = arith.constant 0 : index
    %53 = vector.load %arg3[%c0_24, %c0_25] : memref<128x512xbf16, #tpu.memory_space<vmem>>, vector<128x512xbf16>
    %cst_26 = arith.constant dense<0.000000e+00> : vector<8x512xf32>
    %54 = tpu.matmul %52, %53, %cst_26 {dimension_numbers = #tpu.dot_dimension_numbers<[1], [0], [0], [1], [0, 0, 1, 1], [], []>} : vector<8x128xbf16>, vector<128x512xbf16>, vector<8x512xf32> -> vector<8x512xf32>
    %55 = arith.addf %51, %54 : vector<8x512xf32>
    %56 = vector.extract_strided_slice %55 {offsets = [0, 0], sizes = [8, 128], strides = [1, 1]} : vector<8x512xf32> to vector<8x128xf32>
    %cst_27 = arith.constant 5.000000e-01 : f32
    %57 = vector.broadcast %cst_27 : f32 to vector<8x128xf32>
    %58 = arith.mulf %57, %56 : vector<8x128xf32>
    %59 = math.tanh %58 : vector<8x128xf32>
    %cst_28 = arith.constant 5.000000e-01 : f32
    %60 = vector.broadcast %cst_28 : f32 to vector<8x128xf32>
    %61 = arith.mulf %60, %59 : vector<8x128xf32>
    %cst_29 = arith.constant 5.000000e-01 : f32
    %62 = vector.broadcast %cst_29 : f32 to vector<8x128xf32>
    %63 = arith.addf %62, %61 : vector<8x128xf32>
    %64 = vector.extract_strided_slice %55 {offsets = [0, 128], sizes = [8, 128], strides = [1, 1]} : vector<8x512xf32> to vector<8x128xf32>
    %cst_30 = arith.constant 5.000000e-01 : f32
    %65 = vector.broadcast %cst_30 : f32 to vector<8x128xf32>
    %66 = arith.mulf %65, %64 : vector<8x128xf32>
    %67 = math.tanh %66 : vector<8x128xf32>
    %cst_31 = arith.constant 5.000000e-01 : f32
    %68 = vector.broadcast %cst_31 : f32 to vector<8x128xf32>
    %69 = arith.mulf %68, %67 : vector<8x128xf32>
    %cst_32 = arith.constant 5.000000e-01 : f32
    %70 = vector.broadcast %cst_32 : f32 to vector<8x128xf32>
    %71 = arith.addf %70, %69 : vector<8x128xf32>
    %72 = vector.extract_strided_slice %55 {offsets = [0, 256], sizes = [8, 128], strides = [1, 1]} : vector<8x512xf32> to vector<8x128xf32>
    %73 = math.tanh %72 : vector<8x128xf32>
    %74 = vector.extract_strided_slice %55 {offsets = [0, 384], sizes = [8, 128], strides = [1, 1]} : vector<8x512xf32> to vector<8x128xf32>
    %cst_33 = arith.constant 5.000000e-01 : f32
    %75 = vector.broadcast %cst_33 : f32 to vector<8x128xf32>
    %76 = arith.mulf %75, %74 : vector<8x128xf32>
    %77 = math.tanh %76 : vector<8x128xf32>
    %cst_34 = arith.constant 5.000000e-01 : f32
    %78 = vector.broadcast %cst_34 : f32 to vector<8x128xf32>
    %79 = arith.mulf %78, %77 : vector<8x128xf32>
    %cst_35 = arith.constant 5.000000e-01 : f32
    %80 = vector.broadcast %cst_35 : f32 to vector<8x128xf32>
    %81 = arith.addf %80, %79 : vector<8x128xf32>
    %82 = arith.mulf %71, %45 : vector<8x128xf32>
    %83 = arith.mulf %63, %73 : vector<8x128xf32>
    %84 = arith.addf %82, %83 : vector<8x128xf32>
    %85 = math.tanh %84 : vector<8x128xf32>
    %86 = arith.mulf %81, %85 : vector<8x128xf32>
    %c2_i32 = arith.constant 2 : i32
    %c8_i32_36 = arith.constant 8 : i32
    %87 = arith.muli %c2_i32, %c8_i32_36 : i32
    %88 = tpu.assume_multiple %87, 8 : i32
    %89 = arith.index_cast %88 : i32 to index
    %c0_37 = arith.constant 0 : index
    %90 = vector.load %arg10[%89, %c0_37] : memref<64x512xf32, #tpu.memory_space<vmem>>, vector<8x512xf32>
    %91 = arith.truncf %86 : vector<8x128xf32> to vector<8x128xbf16>
    %c0_38 = arith.constant 0 : index
    %c0_39 = arith.constant 0 : index
    %92 = vector.load %arg3[%c0_38, %c0_39] : memref<128x512xbf16, #tpu.memory_space<vmem>>, vector<128x512xbf16>
    %cst_40 = arith.constant dense<0.000000e+00> : vector<8x512xf32>
    %93 = tpu.matmul %91, %92, %cst_40 {dimension_numbers = #tpu.dot_dimension_numbers<[1], [0], [0], [1], [0, 0, 1, 1], [], []>} : vector<8x128xbf16>, vector<128x512xbf16>, vector<8x512xf32> -> vector<8x512xf32>
    %94 = arith.addf %90, %93 : vector<8x512xf32>
    %95 = vector.extract_strided_slice %94 {offsets = [0, 0], sizes = [8, 128], strides = [1, 1]} : vector<8x512xf32> to vector<8x128xf32>
    %cst_41 = arith.constant 5.000000e-01 : f32
    %96 = vector.broadcast %cst_41 : f32 to vector<8x128xf32>
    %97 = arith.mulf %96, %95 : vector<8x128xf32>
    %98 = math.tanh %97 : vector<8x128xf32>
    %cst_42 = arith.constant 5.000000e-01 : f32
    %99 = vector.broadcast %cst_42 : f32 to vector<8x128xf32>
    %100 = arith.mulf %99, %98 : vector<8x128xf32>
    %cst_43 = arith.constant 5.000000e-01 : f32
    %101 = vector.broadcast %cst_43 : f32 to vector<8x128xf32>
    %102 = arith.addf %101, %100 : vector<8x128xf32>
    %103 = vector.extract_strided_slice %94 {offsets = [0, 128], sizes = [8, 128], strides = [1, 1]} : vector<8x512xf32> to vector<8x128xf32>
    %cst_44 = arith.constant 5.000000e-01 : f32
    %104 = vector.broadcast %cst_44 : f32 to vector<8x128xf32>
    %105 = arith.mulf %104, %103 : vector<8x128xf32>
    %106 = math.tanh %105 : vector<8x128xf32>
    %cst_45 = arith.constant 5.000000e-01 : f32
    %107 = vector.broadcast %cst_45 : f32 to vector<8x128xf32>
    %108 = arith.mulf %107, %106 : vector<8x128xf32>
    %cst_46 = arith.constant 5.000000e-01 : f32
    %109 = vector.broadcast %cst_46 : f32 to vector<8x128xf32>
    %110 = arith.addf %109, %108 : vector<8x128xf32>
    %111 = vector.extract_strided_slice %94 {offsets = [0, 256], sizes = [8, 128], strides = [1, 1]} : vector<8x512xf32> to vector<8x128xf32>
    %112 = math.tanh %111 : vector<8x128xf32>
    %113 = vector.extract_strided_slice %94 {offsets = [0, 384], sizes = [8, 128], strides = [1, 1]} : vector<8x512xf32> to vector<8x128xf32>
    %cst_47 = arith.constant 5.000000e-01 : f32
    %114 = vector.broadcast %cst_47 : f32 to vector<8x128xf32>
    %115 = arith.mulf %114, %113 : vector<8x128xf32>
    %116 = math.tanh %115 : vector<8x128xf32>
    %cst_48 = arith.constant 5.000000e-01 : f32
    %117 = vector.broadcast %cst_48 : f32 to vector<8x128xf32>
    %118 = arith.mulf %117, %116 : vector<8x128xf32>
    %cst_49 = arith.constant 5.000000e-01 : f32
    %119 = vector.broadcast %cst_49 : f32 to vector<8x128xf32>
    %120 = arith.addf %119, %118 : vector<8x128xf32>
    %121 = arith.mulf %110, %84 : vector<8x128xf32>
    %122 = arith.mulf %102, %112 : vector<8x128xf32>
    %123 = arith.addf %121, %122 : vector<8x128xf32>
    %124 = math.tanh %123 : vector<8x128xf32>
    %125 = arith.mulf %120, %124 : vector<8x128xf32>
    %c3_i32 = arith.constant 3 : i32
    %c8_i32_50 = arith.constant 8 : i32
    %126 = arith.muli %c3_i32, %c8_i32_50 : i32
    %127 = tpu.assume_multiple %126, 8 : i32
    %128 = arith.index_cast %127 : i32 to index
    %c0_51 = arith.constant 0 : index
    %129 = vector.load %arg10[%128, %c0_51] : memref<64x512xf32, #tpu.memory_space<vmem>>, vector<8x512xf32>
    %130 = arith.truncf %125 : vector<8x128xf32> to vector<8x128xbf16>
    %c0_52 = arith.constant 0 : index
    %c0_53 = arith.constant 0 : index
    %131 = vector.load %arg3[%c0_52, %c0_53] : memref<128x512xbf16, #tpu.memory_space<vmem>>, vector<128x512xbf16>
    %cst_54 = arith.constant dense<0.000000e+00> : vector<8x512xf32>
    %132 = tpu.matmul %130, %131, %cst_54 {dimension_numbers = #tpu.dot_dimension_numbers<[1], [0], [0], [1], [0, 0, 1, 1], [], []>} : vector<8x128xbf16>, vector<128x512xbf16>, vector<8x512xf32> -> vector<8x512xf32>
    %133 = arith.addf %129, %132 : vector<8x512xf32>
    %134 = vector.extract_strided_slice %133 {offsets = [0, 0], sizes = [8, 128], strides = [1, 1]} : vector<8x512xf32> to vector<8x128xf32>
    %cst_55 = arith.constant 5.000000e-01 : f32
    %135 = vector.broadcast %cst_55 : f32 to vector<8x128xf32>
    %136 = arith.mulf %135, %134 : vector<8x128xf32>
    %137 = math.tanh %136 : vector<8x128xf32>
    %cst_56 = arith.constant 5.000000e-01 : f32
    %138 = vector.broadcast %cst_56 : f32 to vector<8x128xf32>
    %139 = arith.mulf %138, %137 : vector<8x128xf32>
    %cst_57 = arith.constant 5.000000e-01 : f32
    %140 = vector.broadcast %cst_57 : f32 to vector<8x128xf32>
    %141 = arith.addf %140, %139 : vector<8x128xf32>
    %142 = vector.extract_strided_slice %133 {offsets = [0, 128], sizes = [8, 128], strides = [1, 1]} : vector<8x512xf32> to vector<8x128xf32>
    %cst_58 = arith.constant 5.000000e-01 : f32
    %143 = vector.broadcast %cst_58 : f32 to vector<8x128xf32>
    %144 = arith.mulf %143, %142 : vector<8x128xf32>
    %145 = math.tanh %144 : vector<8x128xf32>
    %cst_59 = arith.constant 5.000000e-01 : f32
    %146 = vector.broadcast %cst_59 : f32 to vector<8x128xf32>
    %147 = arith.mulf %146, %145 : vector<8x128xf32>
    %cst_60 = arith.constant 5.000000e-01 : f32
    %148 = vector.broadcast %cst_60 : f32 to vector<8x128xf32>
    %149 = arith.addf %148, %147 : vector<8x128xf32>
    %150 = vector.extract_strided_slice %133 {offsets = [0, 256], sizes = [8, 128], strides = [1, 1]} : vector<8x512xf32> to vector<8x128xf32>
    %151 = math.tanh %150 : vector<8x128xf32>
    %152 = vector.extract_strided_slice %133 {offsets = [0, 384], sizes = [8, 128], strides = [1, 1]} : vector<8x512xf32> to vector<8x128xf32>
    %cst_61 = arith.constant 5.000000e-01 : f32
    %153 = vector.broadcast %cst_61 : f32 to vector<8x128xf32>
    %154 = arith.mulf %153, %152 : vector<8x128xf32>
    %155 = math.tanh %154 : vector<8x128xf32>
    %cst_62 = arith.constant 5.000000e-01 : f32
    %156 = vector.broadcast %cst_62 : f32 to vector<8x128xf32>
    %157 = arith.mulf %156, %155 : vector<8x128xf32>
    %cst_63 = arith.constant 5.000000e-01 : f32
    %158 = vector.broadcast %cst_63 : f32 to vector<8x128xf32>
    %159 = arith.addf %158, %157 : vector<8x128xf32>
    %160 = arith.mulf %149, %123 : vector<8x128xf32>
    %161 = arith.mulf %141, %151 : vector<8x128xf32>
    %162 = arith.addf %160, %161 : vector<8x128xf32>
    %163 = math.tanh %162 : vector<8x128xf32>
    %164 = arith.mulf %159, %163 : vector<8x128xf32>
    %c4_i32 = arith.constant 4 : i32
    %c8_i32_64 = arith.constant 8 : i32
    %165 = arith.muli %c4_i32, %c8_i32_64 : i32
    %166 = tpu.assume_multiple %165, 8 : i32
    %167 = arith.index_cast %166 : i32 to index
    %c0_65 = arith.constant 0 : index
    %168 = vector.load %arg10[%167, %c0_65] : memref<64x512xf32, #tpu.memory_space<vmem>>, vector<8x512xf32>
    %169 = arith.truncf %164 : vector<8x128xf32> to vector<8x128xbf16>
    %c0_66 = arith.constant 0 : index
    %c0_67 = arith.constant 0 : index
    %170 = vector.load %arg3[%c0_66, %c0_67] : memref<128x512xbf16, #tpu.memory_space<vmem>>, vector<128x512xbf16>
    %cst_68 = arith.constant dense<0.000000e+00> : vector<8x512xf32>
    %171 = tpu.matmul %169, %170, %cst_68 {dimension_numbers = #tpu.dot_dimension_numbers<[1], [0], [0], [1], [0, 0, 1, 1], [], []>} : vector<8x128xbf16>, vector<128x512xbf16>, vector<8x512xf32> -> vector<8x512xf32>
    %172 = arith.addf %168, %171 : vector<8x512xf32>
    %173 = vector.extract_strided_slice %172 {offsets = [0, 0], sizes = [8, 128], strides = [1, 1]} : vector<8x512xf32> to vector<8x128xf32>
    %cst_69 = arith.constant 5.000000e-01 : f32
    %174 = vector.broadcast %cst_69 : f32 to vector<8x128xf32>
    %175 = arith.mulf %174, %173 : vector<8x128xf32>
    %176 = math.tanh %175 : vector<8x128xf32>
    %cst_70 = arith.constant 5.000000e-01 : f32
    %177 = vector.broadcast %cst_70 : f32 to vector<8x128xf32>
    %178 = arith.mulf %177, %176 : vector<8x128xf32>
    %cst_71 = arith.constant 5.000000e-01 : f32
    %179 = vector.broadcast %cst_71 : f32 to vector<8x128xf32>
    %180 = arith.addf %179, %178 : vector<8x128xf32>
    %181 = vector.extract_strided_slice %172 {offsets = [0, 128], sizes = [8, 128], strides = [1, 1]} : vector<8x512xf32> to vector<8x128xf32>
    %cst_72 = arith.constant 5.000000e-01 : f32
    %182 = vector.broadcast %cst_72 : f32 to vector<8x128xf32>
    %183 = arith.mulf %182, %181 : vector<8x128xf32>
    %184 = math.tanh %183 : vector<8x128xf32>
    %cst_73 = arith.constant 5.000000e-01 : f32
    %185 = vector.broadcast %cst_73 : f32 to vector<8x128xf32>
    %186 = arith.mulf %185, %184 : vector<8x128xf32>
    %cst_74 = arith.constant 5.000000e-01 : f32
    %187 = vector.broadcast %cst_74 : f32 to vector<8x128xf32>
    %188 = arith.addf %187, %186 : vector<8x128xf32>
    %189 = vector.extract_strided_slice %172 {offsets = [0, 256], sizes = [8, 128], strides = [1, 1]} : vector<8x512xf32> to vector<8x128xf32>
    %190 = math.tanh %189 : vector<8x128xf32>
    %191 = vector.extract_strided_slice %172 {offsets = [0, 384], sizes = [8, 128], strides = [1, 1]} : vector<8x512xf32> to vector<8x128xf32>
    %cst_75 = arith.constant 5.000000e-01 : f32
    %192 = vector.broadcast %cst_75 : f32 to vector<8x128xf32>
    %193 = arith.mulf %192, %191 : vector<8x128xf32>
    %194 = math.tanh %193 : vector<8x128xf32>
    %cst_76 = arith.constant 5.000000e-01 : f32
    %195 = vector.broadcast %cst_76 : f32 to vector<8x128xf32>
    %196 = arith.mulf %195, %194 : vector<8x128xf32>
    %cst_77 = arith.constant 5.000000e-01 : f32
    %197 = vector.broadcast %cst_77 : f32 to vector<8x128xf32>
    %198 = arith.addf %197, %196 : vector<8x128xf32>
    %199 = arith.mulf %188, %162 : vector<8x128xf32>
    %200 = arith.mulf %180, %190 : vector<8x128xf32>
    %201 = arith.addf %199, %200 : vector<8x128xf32>
    %202 = math.tanh %201 : vector<8x128xf32>
    %203 = arith.mulf %198, %202 : vector<8x128xf32>
    %c5_i32 = arith.constant 5 : i32
    %c8_i32_78 = arith.constant 8 : i32
    %204 = arith.muli %c5_i32, %c8_i32_78 : i32
    %205 = tpu.assume_multiple %204, 8 : i32
    %206 = arith.index_cast %205 : i32 to index
    %c0_79 = arith.constant 0 : index
    %207 = vector.load %arg10[%206, %c0_79] : memref<64x512xf32, #tpu.memory_space<vmem>>, vector<8x512xf32>
    %208 = arith.truncf %203 : vector<8x128xf32> to vector<8x128xbf16>
    %c0_80 = arith.constant 0 : index
    %c0_81 = arith.constant 0 : index
    %209 = vector.load %arg3[%c0_80, %c0_81] : memref<128x512xbf16, #tpu.memory_space<vmem>>, vector<128x512xbf16>
    %cst_82 = arith.constant dense<0.000000e+00> : vector<8x512xf32>
    %210 = tpu.matmul %208, %209, %cst_82 {dimension_numbers = #tpu.dot_dimension_numbers<[1], [0], [0], [1], [0, 0, 1, 1], [], []>} : vector<8x128xbf16>, vector<128x512xbf16>, vector<8x512xf32> -> vector<8x512xf32>
    %211 = arith.addf %207, %210 : vector<8x512xf32>
    %212 = vector.extract_strided_slice %211 {offsets = [0, 0], sizes = [8, 128], strides = [1, 1]} : vector<8x512xf32> to vector<8x128xf32>
    %cst_83 = arith.constant 5.000000e-01 : f32
    %213 = vector.broadcast %cst_83 : f32 to vector<8x128xf32>
    %214 = arith.mulf %213, %212 : vector<8x128xf32>
    %215 = math.tanh %214 : vector<8x128xf32>
    %cst_84 = arith.constant 5.000000e-01 : f32
    %216 = vector.broadcast %cst_84 : f32 to vector<8x128xf32>
    %217 = arith.mulf %216, %215 : vector<8x128xf32>
    %cst_85 = arith.constant 5.000000e-01 : f32
    %218 = vector.broadcast %cst_85 : f32 to vector<8x128xf32>
    %219 = arith.addf %218, %217 : vector<8x128xf32>
    %220 = vector.extract_strided_slice %211 {offsets = [0, 128], sizes = [8, 128], strides = [1, 1]} : vector<8x512xf32> to vector<8x128xf32>
    %cst_86 = arith.constant 5.000000e-01 : f32
    %221 = vector.broadcast %cst_86 : f32 to vector<8x128xf32>
    %222 = arith.mulf %221, %220 : vector<8x128xf32>
    %223 = math.tanh %222 : vector<8x128xf32>
    %cst_87 = arith.constant 5.000000e-01 : f32
    %224 = vector.broadcast %cst_87 : f32 to vector<8x128xf32>
    %225 = arith.mulf %224, %223 : vector<8x128xf32>
    %cst_88 = arith.constant 5.000000e-01 : f32
    %226 = vector.broadcast %cst_88 : f32 to vector<8x128xf32>
    %227 = arith.addf %226, %225 : vector<8x128xf32>
    %228 = vector.extract_strided_slice %211 {offsets = [0, 256], sizes = [8, 128], strides = [1, 1]} : vector<8x512xf32> to vector<8x128xf32>
    %229 = math.tanh %228 : vector<8x128xf32>
    %230 = vector.extract_strided_slice %211 {offsets = [0, 384], sizes = [8, 128], strides = [1, 1]} : vector<8x512xf32> to vector<8x128xf32>
    %cst_89 = arith.constant 5.000000e-01 : f32
    %231 = vector.broadcast %cst_89 : f32 to vector<8x128xf32>
    %232 = arith.mulf %231, %230 : vector<8x128xf32>
    %233 = math.tanh %232 : vector<8x128xf32>
    %cst_90 = arith.constant 5.000000e-01 : f32
    %234 = vector.broadcast %cst_90 : f32 to vector<8x128xf32>
    %235 = arith.mulf %234, %233 : vector<8x128xf32>
    %cst_91 = arith.constant 5.000000e-01 : f32
    %236 = vector.broadcast %cst_91 : f32 to vector<8x128xf32>
    %237 = arith.addf %236, %235 : vector<8x128xf32>
    %238 = arith.mulf %227, %201 : vector<8x128xf32>
    %239 = arith.mulf %219, %229 : vector<8x128xf32>
    %240 = arith.addf %238, %239 : vector<8x128xf32>
    %241 = math.tanh %240 : vector<8x128xf32>
    %242 = arith.mulf %237, %241 : vector<8x128xf32>
    %c6_i32 = arith.constant 6 : i32
    %c8_i32_92 = arith.constant 8 : i32
    %243 = arith.muli %c6_i32, %c8_i32_92 : i32
    %244 = tpu.assume_multiple %243, 8 : i32
    %245 = arith.index_cast %244 : i32 to index
    %c0_93 = arith.constant 0 : index
    %246 = vector.load %arg10[%245, %c0_93] : memref<64x512xf32, #tpu.memory_space<vmem>>, vector<8x512xf32>
    %247 = arith.truncf %242 : vector<8x128xf32> to vector<8x128xbf16>
    %c0_94 = arith.constant 0 : index
    %c0_95 = arith.constant 0 : index
    %248 = vector.load %arg3[%c0_94, %c0_95] : memref<128x512xbf16, #tpu.memory_space<vmem>>, vector<128x512xbf16>
    %cst_96 = arith.constant dense<0.000000e+00> : vector<8x512xf32>
    %249 = tpu.matmul %247, %248, %cst_96 {dimension_numbers = #tpu.dot_dimension_numbers<[1], [0], [0], [1], [0, 0, 1, 1], [], []>} : vector<8x128xbf16>, vector<128x512xbf16>, vector<8x512xf32> -> vector<8x512xf32>
    %250 = arith.addf %246, %249 : vector<8x512xf32>
    %251 = vector.extract_strided_slice %250 {offsets = [0, 0], sizes = [8, 128], strides = [1, 1]} : vector<8x512xf32> to vector<8x128xf32>
    %cst_97 = arith.constant 5.000000e-01 : f32
    %252 = vector.broadcast %cst_97 : f32 to vector<8x128xf32>
    %253 = arith.mulf %252, %251 : vector<8x128xf32>
    %254 = math.tanh %253 : vector<8x128xf32>
    %cst_98 = arith.constant 5.000000e-01 : f32
    %255 = vector.broadcast %cst_98 : f32 to vector<8x128xf32>
    %256 = arith.mulf %255, %254 : vector<8x128xf32>
    %cst_99 = arith.constant 5.000000e-01 : f32
    %257 = vector.broadcast %cst_99 : f32 to vector<8x128xf32>
    %258 = arith.addf %257, %256 : vector<8x128xf32>
    %259 = vector.extract_strided_slice %250 {offsets = [0, 128], sizes = [8, 128], strides = [1, 1]} : vector<8x512xf32> to vector<8x128xf32>
    %cst_100 = arith.constant 5.000000e-01 : f32
    %260 = vector.broadcast %cst_100 : f32 to vector<8x128xf32>
    %261 = arith.mulf %260, %259 : vector<8x128xf32>
    %262 = math.tanh %261 : vector<8x128xf32>
    %cst_101 = arith.constant 5.000000e-01 : f32
    %263 = vector.broadcast %cst_101 : f32 to vector<8x128xf32>
    %264 = arith.mulf %263, %262 : vector<8x128xf32>
    %cst_102 = arith.constant 5.000000e-01 : f32
    %265 = vector.broadcast %cst_102 : f32 to vector<8x128xf32>
    %266 = arith.addf %265, %264 : vector<8x128xf32>
    %267 = vector.extract_strided_slice %250 {offsets = [0, 256], sizes = [8, 128], strides = [1, 1]} : vector<8x512xf32> to vector<8x128xf32>
    %268 = math.tanh %267 : vector<8x128xf32>
    %269 = vector.extract_strided_slice %250 {offsets = [0, 384], sizes = [8, 128], strides = [1, 1]} : vector<8x512xf32> to vector<8x128xf32>
    %cst_103 = arith.constant 5.000000e-01 : f32
    %270 = vector.broadcast %cst_103 : f32 to vector<8x128xf32>
    %271 = arith.mulf %270, %269 : vector<8x128xf32>
    %272 = math.tanh %271 : vector<8x128xf32>
    %cst_104 = arith.constant 5.000000e-01 : f32
    %273 = vector.broadcast %cst_104 : f32 to vector<8x128xf32>
    %274 = arith.mulf %273, %272 : vector<8x128xf32>
    %cst_105 = arith.constant 5.000000e-01 : f32
    %275 = vector.broadcast %cst_105 : f32 to vector<8x128xf32>
    %276 = arith.addf %275, %274 : vector<8x128xf32>
    %277 = arith.mulf %266, %240 : vector<8x128xf32>
    %278 = arith.mulf %258, %268 : vector<8x128xf32>
    %279 = arith.addf %277, %278 : vector<8x128xf32>
    %280 = math.tanh %279 : vector<8x128xf32>
    %281 = arith.mulf %276, %280 : vector<8x128xf32>
    %c7_i32 = arith.constant 7 : i32
    %c8_i32_106 = arith.constant 8 : i32
    %282 = arith.muli %c7_i32, %c8_i32_106 : i32
    %283 = tpu.assume_multiple %282, 8 : i32
    %284 = arith.index_cast %283 : i32 to index
    %c0_107 = arith.constant 0 : index
    %285 = vector.load %arg10[%284, %c0_107] : memref<64x512xf32, #tpu.memory_space<vmem>>, vector<8x512xf32>
    %286 = arith.truncf %281 : vector<8x128xf32> to vector<8x128xbf16>
    %c0_108 = arith.constant 0 : index
    %c0_109 = arith.constant 0 : index
    %287 = vector.load %arg3[%c0_108, %c0_109] : memref<128x512xbf16, #tpu.memory_space<vmem>>, vector<128x512xbf16>
    %cst_110 = arith.constant dense<0.000000e+00> : vector<8x512xf32>
    %288 = tpu.matmul %286, %287, %cst_110 {dimension_numbers = #tpu.dot_dimension_numbers<[1], [0], [0], [1], [0, 0, 1, 1], [], []>} : vector<8x128xbf16>, vector<128x512xbf16>, vector<8x512xf32> -> vector<8x512xf32>
    %289 = arith.addf %285, %288 : vector<8x512xf32>
    %290 = vector.extract_strided_slice %289 {offsets = [0, 0], sizes = [8, 128], strides = [1, 1]} : vector<8x512xf32> to vector<8x128xf32>
    %cst_111 = arith.constant 5.000000e-01 : f32
    %291 = vector.broadcast %cst_111 : f32 to vector<8x128xf32>
    %292 = arith.mulf %291, %290 : vector<8x128xf32>
    %293 = math.tanh %292 : vector<8x128xf32>
    %cst_112 = arith.constant 5.000000e-01 : f32
    %294 = vector.broadcast %cst_112 : f32 to vector<8x128xf32>
    %295 = arith.mulf %294, %293 : vector<8x128xf32>
    %cst_113 = arith.constant 5.000000e-01 : f32
    %296 = vector.broadcast %cst_113 : f32 to vector<8x128xf32>
    %297 = arith.addf %296, %295 : vector<8x128xf32>
    %298 = vector.extract_strided_slice %289 {offsets = [0, 128], sizes = [8, 128], strides = [1, 1]} : vector<8x512xf32> to vector<8x128xf32>
    %cst_114 = arith.constant 5.000000e-01 : f32
    %299 = vector.broadcast %cst_114 : f32 to vector<8x128xf32>
    %300 = arith.mulf %299, %298 : vector<8x128xf32>
    %301 = math.tanh %300 : vector<8x128xf32>
    %cst_115 = arith.constant 5.000000e-01 : f32
    %302 = vector.broadcast %cst_115 : f32 to vector<8x128xf32>
    %303 = arith.mulf %302, %301 : vector<8x128xf32>
    %cst_116 = arith.constant 5.000000e-01 : f32
    %304 = vector.broadcast %cst_116 : f32 to vector<8x128xf32>
    %305 = arith.addf %304, %303 : vector<8x128xf32>
    %306 = vector.extract_strided_slice %289 {offsets = [0, 256], sizes = [8, 128], strides = [1, 1]} : vector<8x512xf32> to vector<8x128xf32>
    %307 = math.tanh %306 : vector<8x128xf32>
    %308 = vector.extract_strided_slice %289 {offsets = [0, 384], sizes = [8, 128], strides = [1, 1]} : vector<8x512xf32> to vector<8x128xf32>
    %cst_117 = arith.constant 5.000000e-01 : f32
    %309 = vector.broadcast %cst_117 : f32 to vector<8x128xf32>
    %310 = arith.mulf %309, %308 : vector<8x128xf32>
    %311 = math.tanh %310 : vector<8x128xf32>
    %cst_118 = arith.constant 5.000000e-01 : f32
    %312 = vector.broadcast %cst_118 : f32 to vector<8x128xf32>
    %313 = arith.mulf %312, %311 : vector<8x128xf32>
    %cst_119 = arith.constant 5.000000e-01 : f32
    %314 = vector.broadcast %cst_119 : f32 to vector<8x128xf32>
    %315 = arith.addf %314, %313 : vector<8x128xf32>
    %316 = arith.mulf %305, %279 : vector<8x128xf32>
    %317 = arith.mulf %297, %307 : vector<8x128xf32>
    %318 = arith.addf %316, %317 : vector<8x128xf32>
    %319 = math.tanh %318 : vector<8x128xf32>
    %320 = arith.mulf %315, %319 : vector<8x128xf32>
    %c8_i32_120 = arith.constant 8 : i32
    %c0_121 = arith.constant 0 : index
    %c0_122 = arith.constant 0 : index
    %321 = vector.load %arg1[%c0_121, %c0_122] : memref<8x128xf32, #tpu.memory_space<vmem>>, vector<8x128xf32>
    %322 = tpu.concatenate %321, %320 in 1 : vector<8x128xf32>, vector<8x128xf32> -> vector<8x256xf32>
    %323 = arith.truncf %322 : vector<8x256xf32> to vector<8x256xbf16>
    %c0_123 = arith.constant 0 : index
    %c0_124 = arith.constant 0 : index
    %324 = vector.load %arg5[%c0_123, %c0_124] : memref<256x512xbf16, #tpu.memory_space<vmem>>, vector<256x512xbf16>
    %cst_125 = arith.constant dense<0.000000e+00> : vector<8x512xf32>
    %325 = tpu.matmul %323, %324, %cst_125 {dimension_numbers = #tpu.dot_dimension_numbers<[1], [0], [0], [1], [0, 0, 1, 1], [], []>} : vector<8x256xbf16>, vector<256x512xbf16>, vector<8x512xf32> -> vector<8x512xf32>
    %c0_126 = arith.constant 0 : index
    %c0_127 = arith.constant 0 : index
    %326 = vector.load %arg6[%c0_126, %c0_127] : memref<1x512xf32, #tpu.memory_space<vmem>>, vector<1x512xf32>
    %327 = vector.broadcast %326 : vector<1x512xf32> to vector<8x512xf32>
    %328 = arith.addf %325, %327 : vector<8x512xf32>
    %329 = math.tanh %328 : vector<8x512xf32>
    %c0_128 = arith.constant 0 : index
    %c0_129 = arith.constant 0 : index
    %330 = vector.load %arg7[%c0_128, %c0_129] : memref<8x256xf32, #tpu.memory_space<vmem>>, vector<8x256xf32>
    %331 = vector.extract_strided_slice %329 {offsets = [0, 0], sizes = [8, 256], strides = [1, 1]} : vector<8x512xf32> to vector<8x256xf32>
    %332 = arith.mulf %330, %331 : vector<8x256xf32>
    %c0_130 = arith.constant 0 : index
    %c0_131 = arith.constant 0 : index
    %333 = vector.load %arg8[%c0_130, %c0_131] : memref<8x256xf32, #tpu.memory_space<vmem>>, vector<8x256xf32>
    tpu.vector_store %arg8[%c0_130, %c0_131], %332 {strides = array<i32>} : memref<8x256xf32, #tpu.memory_space<vmem>>, vector<8x256xf32>,
    %334 = vector.extract_strided_slice %329 {offsets = [0, 256], sizes = [8, 256], strides = [1, 1]} : vector<8x512xf32> to vector<8x256xf32>
    %335 = arith.mulf %330, %334 : vector<8x256xf32>
    %c0_132 = arith.constant 0 : index
    %c0_133 = arith.constant 0 : index
    %336 = vector.load %arg9[%c0_132, %c0_133] : memref<8x256xf32, #tpu.memory_space<vmem>>, vector<8x256xf32>
    tpu.vector_store %arg9[%c0_132, %c0_133], %335 {strides = array<i32>} : memref<8x256xf32, #tpu.memory_space<vmem>>, vector<8x256xf32>,
    return
  }
}

</mosaic_0001>

<llo_original>
// kernel: tpu_custom_call.1
$region0: #{tpu_custom_call.1}
  #allocation0 [shape = 'u32[]', space=smem, size = 0x4, offset = 0x4, fixed_abs, tag = 'smem constant byte address 0x4 - core index']
  #allocation1 [shape = 'u32[72,128]{1,0:T(1,128)}', space=vmem, size = 0x9000, scoped, tag = 'internal scratch']
  #allocation2 [shape = 'f32[64,512]{1,0:T(8,128)}', space=vmem, size = 0x20000, scoped, tag = 'scratch operand']
  %s0 = inlined_call_operand.hbm [shape: bf16[64,144], index: 0, kind: input, shape index: {}]
  %s1 = inlined_call_operand.hbm [shape: f32[8,128], index: 1, kind: input, shape index: {}]
  %s2 = inlined_call_operand.hbm [shape: bf16[144,512], index: 2, kind: input, shape index: {}]
  %s3 = inlined_call_operand.hbm [shape: bf16[128,512], index: 3, kind: input, shape index: {}]
  %s4 = inlined_call_operand.hbm [shape: f32[1,512], index: 4, kind: input, shape index: {}]
  %s5 = inlined_call_operand.hbm [shape: bf16[256,512], index: 5, kind: input, shape index: {}]
  %s6 = inlined_call_operand.vmem [shape: f32[1,512], index: 6, kind: input, shape index: {}]
  %s7 = inlined_call_operand.hbm [shape: f32[8,256], index: 7, kind: input, shape index: {}]
  %s8 = inlined_call_operand.hbm [shape: f32[8,256], index: 8, kind: output, shape index: {0}]
  %s9 = inlined_call_operand.hbm [shape: f32[8,256], index: 9, kind: output, shape index: {1}]
  %10 = xla_tuple %s8, %s9
  %s11 = sld [smem:[#allocation0]]
  $region78: #{tpu_custom_call.1} parent=0
    _
  %s13 = ssub.s32 1, %s11
  %s14 = scalar_select 0, %s13, %s11
  $region1: #{tpu_custom_call.1} parent=0
    #allocation3 [shape = 'u8[32768]{0}', space=vmem, size = 0x8000, scoped, tag = 'input window, operand 0, single buffered']
    #allocation4 [shape = 's32[1]{0}', space=sflag, size = 0x4, scoped, tag = 'scoped memory for tpu_custom_call.1']
    #allocation5 [shape = 's32[1]{0}', space=sflag, size = 0x4, scoped, tag = 'scoped memory for tpu_custom_call.1']
    #allocation6 [shape = 'u8[4096]{0}', space=vmem, size = 0x1000, scoped, tag = 'input window, operand 1, single buffered']
    #allocation7 [shape = 's32[1]{0}', space=sflag, size = 0x4, scoped, tag = 'scoped memory for tpu_custom_call.1']
    #allocation8 [shape = 'u8[147456]{0}', space=vmem, size = 0x24000, scoped, tag = 'input window, operand 2, single buffered']
    #allocation9 [shape = 'u8[131072]{0}', space=vmem, size = 0x20000, scoped, tag = 'input window, operand 3, single buffered']
    #allocation10 [shape = 's32[1]{0}', space=sflag, size = 0x4, scoped, tag = 'scoped memory for tpu_custom_call.1']
    #allocation11 [shape = 'u8[2048]{0}', space=vmem, size = 0x800, scoped, tag = 'input window, operand 4, single buffered']
    #allocation12 [shape = 'u8[262144]{0}', space=vmem, size = 0x40000, scoped, tag = 'input window, operand 5, single buffered']
    #allocation13 [shape = 's32[1]{0}', space=sflag, size = 0x4, scoped, tag = 'scoped memory for tpu_custom_call.1']
    #allocation14 [shape = 'u8[8192]{0}', space=vmem, size = 0x2000, scoped, tag = 'input window, operand 7, single buffered']
    #allocation15 [shape = 'u8[8192]{0}', space=vmem, size = 0x2000, scoped, tag = 'output window, operand 0, single buffered']
    #allocation16 [shape = 'u8[8192]{0}', space=vmem, size = 0x2000, scoped, tag = 'output window, operand 1, single buffered']
    #allocation17 [shape = 's32[1]{0}', space=sflag, size = 0x4, scoped, tag = 'scoped memory for tpu_custom_call.1']
    %15 = vsyncpa [#allocation4], 0
    %16 = vsyncpa [#allocation7], 0
    %17 = vsyncpa [#allocation10], 0
    %18 = vsyncpa [#allocation13], 0
    %19 = vsyncpa [#allocation5], 0
    %20 = vsyncpa [#allocation17], 0
    // Predicated region
    $region2: #{tpu_custom_call.1} parent=1 // pred_check
      _
    $region3: #{tpu_custom_call.1} parent=1 // pred_check_branch
      %22 = sbr.rel (0) target = $region5
    $region4: #{tpu_custom_call.1} parent=1 // pred_region
      %24 = vsyncadd [#allocation4], 0
      %s25 = sshll.u32 %s0, 4
      %s26 = int_to_ptr.hbm [resolvable:$true] %s25
      %s27 = sshll.u32 [#allocation3], 4
      %s28 = int_to_ptr.vmem [resolvable:$true] %s27
      %33 = dma.hbm_to_vmem [thread:$0]  %s26, 1024, %s28, [#allocation4], 128, 128, 8
    $region5: #{tpu_custom_call.1} parent=1 // pred_fallthru
      _
    // Predicated region
    $region6: #{tpu_custom_call.1} parent=1 // pred_check
      _
    $region7: #{tpu_custom_call.1} parent=1 // pred_check_branch
      %35 = sbr.rel (0) target = $region9
    $region8: #{tpu_custom_call.1} parent=1 // pred_region
      %37 = vsyncadd [#allocation7], 0
      %s39 = sshll.u32 %s1, 4
      %s40 = int_to_ptr.hbm [resolvable:$true] %s39
      %s41 = sshll.u32 [#allocation6], 4
      %s42 = int_to_ptr.vmem [resolvable:$true] %s41
      %44 = dma.hbm_to_vmem [thread:$0]  %s40, 128, %s42, [#allocation7]
    $region9: #{tpu_custom_call.1} parent=1 // pred_fallthru
      _
    // Predicated region
    $region10: #{tpu_custom_call.1} parent=1 // pred_check
      _
    $region11: #{tpu_custom_call.1} parent=1 // pred_check_branch
      %46 = sbr.rel (0) target = $region13
    $region12: #{tpu_custom_call.1} parent=1 // pred_region
      %48 = vsyncadd [#allocation7], 0
      %s49 = sshll.u32 %s2, 4
      %s50 = int_to_ptr.hbm [resolvable:$true] %s49
      %s51 = sshll.u32 [#allocation8], 4
      %s52 = int_to_ptr.vmem [resolvable:$true] %s51
      %57 = dma.hbm_to_vmem [thread:$0]  %s50, 4608, %s52, [#allocation7], 256, 256, 16
    $region13: #{tpu_custom_call.1} parent=1 // pred_fallthru
      _
    // Predicated region
    $region14: #{tpu_custom_call.1} parent=1 // pred_check
      _
    $region15: #{tpu_custom_call.1} parent=1 // pred_check_branch
      %59 = sbr.rel (0) target = $region17
    $region16: #{tpu_custom_call.1} parent=1 // pred_region
      %61 = vsyncadd [#allocation10], 0
      %s62 = sshll.u32 %s3, 4
      %s63 = int_to_ptr.hbm [resolvable:$true] %s62
      %s64 = sshll.u32 [#allocation9], 4
      %s65 = int_to_ptr.vmem [resolvable:$true] %s64
      %70 = dma.hbm_to_vmem [thread:$0]  %s63, 4096, %s65, [#allocation10], 256, 256, 16
    $region17: #{tpu_custom_call.1} parent=1 // pred_fallthru
      _
    // Predicated region
    $region18: #{tpu_custom_call.1} parent=1 // pred_check
      _
    $region19: #{tpu_custom_call.1} parent=1 // pred_check_branch
      %72 = sbr.rel (0) target = $region21
    $region20: #{tpu_custom_call.1} parent=1 // pred_region
      %74 = vsyncadd [#allocation10], 0
      %s76 = sshll.u32 %s4, 4
      %s77 = int_to_ptr.hbm [resolvable:$true] %s76
      %s78 = sshll.u32 [#allocation11], 4
      %s79 = int_to_ptr.vmem [resolvable:$true] %s78
      %81 = dma.hbm_to_vmem [thread:$0]  %s77, 64, %s79, [#allocation10]
    $region21: #{tpu_custom_call.1} parent=1 // pred_fallthru
      _
    // Predicated region
    $region22: #{tpu_custom_call.1} parent=1 // pred_check
      _
    $region23: #{tpu_custom_call.1} parent=1 // pred_check_branch
      %83 = sbr.rel (0) target = $region25
    $region24: #{tpu_custom_call.1} parent=1 // pred_region
      %85 = vsyncadd [#allocation13], 0
      %s86 = sshll.u32 %s5, 4
      %s87 = int_to_ptr.hbm [resolvable:$true] %s86
      %s88 = sshll.u32 [#allocation12], 4
      %s89 = int_to_ptr.vmem [resolvable:$true] %s88
      %94 = dma.hbm_to_vmem [thread:$0]  %s87, 8192, %s89, [#allocation13], 256, 256, 16
    $region25: #{tpu_custom_call.1} parent=1 // pred_fallthru
      _
    // Predicated region
    $region26: #{tpu_custom_call.1} parent=1 // pred_check
      _
    $region27: #{tpu_custom_call.1} parent=1 // pred_check_branch
      %96 = sbr.rel (0) target = $region29
    $region28: #{tpu_custom_call.1} parent=1 // pred_region
      _
    $region29: #{tpu_custom_call.1} parent=1 // pred_fallthru
      _
    // Predicated region
    $region30: #{tpu_custom_call.1} parent=1 // pred_check
      _
    $region31: #{tpu_custom_call.1} parent=1 // pred_check_branch
      %98 = sbr.rel (0) target = $region33
    $region32: #{tpu_custom_call.1} parent=1 // pred_region
      %100 = vsyncadd [#allocation13], 0
      %s102 = sshll.u32 %s7, 4
      %s103 = int_to_ptr.hbm [resolvable:$true] %s102
      %s104 = sshll.u32 [#allocation14], 4
      %s105 = int_to_ptr.vmem [resolvable:$true] %s104
      %107 = dma.hbm_to_vmem [thread:$0]  %s103, 256, %s105, [#allocation13]
    $region33: #{tpu_custom_call.1} parent=1 // pred_fallthru
      _
    // Predicated region
    $region34: #{tpu_custom_call.1} parent=1 // pred_check
      _
    $region35: #{tpu_custom_call.1} parent=1 // pred_check_branch
      %109 = sbr.rel (0) target = $region37
    $region36: #{tpu_custom_call.1} parent=1 // pred_region
      %111 = dma.done [#allocation4], 1024
    $region37: #{tpu_custom_call.1} parent=1 // pred_fallthru
      _
    // Predicated region
    $region38: #{tpu_custom_call.1} parent=1 // pred_check
      _
    $region39: #{tpu_custom_call.1} parent=1 // pred_check_branch
      %113 = sbr.rel (0) target = $region41
    $region40: #{tpu_custom_call.1} parent=1 // pred_region
      %115 = dma.done [#allocation7], 128
    $region41: #{tpu_custom_call.1} parent=1 // pred_fallthru
      _
    // Predicated region
    $region42: #{tpu_custom_call.1} parent=1 // pred_check
      _
    $region43: #{tpu_custom_call.1} parent=1 // pred_check_branch
      %117 = sbr.rel (0) target = $region45
    $region44: #{tpu_custom_call.1} parent=1 // pred_region
      %119 = dma.done [#allocation7], 4608
    $region45: #{tpu_custom_call.1} parent=1 // pred_fallthru
      _
    // Predicated region
    $region46: #{tpu_custom_call.1} parent=1 // pred_check
      _
    $region47: #{tpu_custom_call.1} parent=1 // pred_check_branch
      %121 = sbr.rel (0) target = $region49
    $region48: #{tpu_custom_call.1} parent=1 // pred_region
      %123 = dma.done [#allocation10], 4096
    $region49: #{tpu_custom_call.1} parent=1 // pred_fallthru
      _
    // Predicated region
    $region50: #{tpu_custom_call.1} parent=1 // pred_check
      _
    $region51: #{tpu_custom_call.1} parent=1 // pred_check_branch
      %125 = sbr.rel (0) target = $region53
    $region52: #{tpu_custom_call.1} parent=1 // pred_region
      %127 = dma.done [#allocation10], 64
    $region53: #{tpu_custom_call.1} parent=1 // pred_fallthru
      _
    // Predicated region
    $region54: #{tpu_custom_call.1} parent=1 // pred_check
      _
    $region55: #{tpu_custom_call.1} parent=1 // pred_check_branch
      %129 = sbr.rel (0) target = $region57
    $region56: #{tpu_custom_call.1} parent=1 // pred_region
      %131 = dma.done [#allocation13], 8192
    $region57: #{tpu_custom_call.1} parent=1 // pred_fallthru
      _
    // Predicated region
    $region58: #{tpu_custom_call.1} parent=1 // pred_check
      _
    $region59: #{tpu_custom_call.1} parent=1 // pred_check_branch
      %133 = sbr.rel (0) target = $region61
    $region60: #{tpu_custom_call.1} parent=1 // pred_region
      %135 = dma.done [#allocation13], 256
    $region61: #{tpu_custom_call.1} parent=1 // pred_fallthru
      _
    %v137 = vld [vmem:[#allocation3] sm:$0xff]
    %v138 = vld [vmem:[#allocation3 + $0x8] sm:$0xff]
    %v139 = vld [vmem:[#allocation3 + $0x10] sm:$0xff]
    %v140 = vld [vmem:[#allocation3 + $0x18] sm:$0xff]
    %v141 = vld [vmem:[#allocation3 + $0x20] sm:$0xff]
    %v142 = vld [vmem:[#allocation3 + $0x28] sm:$0xff]
    %v143 = vld [vmem:[#allocation3 + $0x30] sm:$0xff]
    %v144 = vld [vmem:[#allocation3 + $0x38] sm:$0xff]
    %v145 = vld [vmem:[#allocation8] sm:$0xff]
    %v146 = vld [vmem:[#allocation8 + $0x8] sm:$0xff]
    %v147 = vld [vmem:[#allocation8 + $0x10] sm:$0xff]
    %v148 = vld [vmem:[#allocation8 + $0x18] sm:$0xff]
    %v149 = vld [vmem:[#allocation8 + $0x20] sm:$0xff]
    %v150 = vld [vmem:[#allocation8 + $0x28] sm:$0xff]
    %v151 = vld [vmem:[#allocation8 + $0x30] sm:$0xff]
    %v152 = vld [vmem:[#allocation8 + $0x38] sm:$0xff]
    %v153 = vld [vmem:[#allocation8 + $0x40] sm:$0xff]
    %v154 = vld [vmem:[#allocation8 + $0x48] sm:$0xff]
    %v155 = vld [vmem:[#allocation8 + $0x50] sm:$0xff]
    %v156 = vld [vmem:[#allocation8 + $0x58] sm:$0xff]
    %v157 = vld [vmem:[#allocation8 + $0x60] sm:$0xff]
    %v158 = vld [vmem:[#allocation8 + $0x68] sm:$0xff]
    %v159 = vld [vmem:[#allocation8 + $0x70] sm:$0xff]
    %v160 = vld [vmem:[#allocation8 + $0x78] sm:$0xff]
    %v161 = vld [vmem:[#allocation8 + $0x80] sm:$0xff]
    %v162 = vld [vmem:[#allocation8 + $0x88] sm:$0xff]
    %v163 = vld [vmem:[#allocation8 + $0x90] sm:$0xff]
    %v164 = vld [vmem:[#allocation8 + $0x98] sm:$0xff]
    %v165 = vld [vmem:[#allocation8 + $0xa0] sm:$0xff]
    %v166 = vld [vmem:[#allocation8 + $0xa8] sm:$0xff]
    %v167 = vld [vmem:[#allocation8 + $0xb0] sm:$0xff]
    %v168 = vld [vmem:[#allocation8 + $0xb8] sm:$0xff]
    %v169 = vld [vmem:[#allocation8 + $0xc0] sm:$0xff]
    %v170 = vld [vmem:[#allocation8 + $0xc8] sm:$0xff]
    %v171 = vld [vmem:[#allocation8 + $0xd0] sm:$0xff]
    %v172 = vld [vmem:[#allocation8 + $0xd8] sm:$0xff]
    %v173 = vld [vmem:[#allocation8 + $0xe0] sm:$0xff]
    %v174 = vld [vmem:[#allocation8 + $0xe8] sm:$0xff]
    %v175 = vld [vmem:[#allocation8 + $0xf0] sm:$0xff]
    %v176 = vld [vmem:[#allocation8 + $0xf8] sm:$0xff]
    %v177 = vld [vmem:[#allocation8 + $0x100] sm:$0xff]
    %v178 = vld [vmem:[#allocation8 + $0x108] sm:$0xff]
    %v179 = vld [vmem:[#allocation8 + $0x110] sm:$0xff]
    %v180 = vld [vmem:[#allocation8 + $0x118] sm:$0xff]
    %v181 = vld [vmem:[#allocation11] sm:$0xf]
    %v183 = vperm.slane %v181, 0
    %v184 = vperm.slane %v181, 1
    %v185 = vperm.slane %v181, 2
    %v186 = vperm.slane %v181, 3
    %v199 = vunpack.c.l.b16 %v137
    %v200 = vunpack.c.h.b16 %v137
    %v201 = vunpack.c.l.b16 %v138
    %v202 = vunpack.c.h.b16 %v138
    %v203 = vunpack.c.l.b16 %v139
    %v204 = vunpack.c.h.b16 %v139
    %v205 = vunpack.c.l.b16 %v140
    %v206 = vunpack.c.h.b16 %v140
    %v207 = vunpack.c.l.b16 %v141
    %v208 = vunpack.c.h.b16 %v141
    %v209 = vunpack.c.l.b16 %v142
    %v210 = vunpack.c.h.b16 %v142
    %v211 = vunpack.c.l.b16 %v143
    %v212 = vunpack.c.h.b16 %v143
    %v213 = vunpack.c.l.b16 %v144
    %v214 = vunpack.c.h.b16 %v144
    %v215 = vpack.c.b16 %v201, %v199
    %v216 = vpack.c.b16 %v202, %v200
    %v217 = vpack.c.b16 %v205, %v203
    %v218 = vpack.c.b16 %v206, %v204
    %v219 = vpack.c.b16 %v209, %v207
    %v220 = vpack.c.b16 %v210, %v208
    %v221 = vpack.c.b16 %v213, %v211
    %v222 = vpack.c.b16 %v214, %v212
    %v263 = vunpack.c.l.b16 %v145
    %v264 = vunpack.c.h.b16 %v145
    %v265 = vunpack.c.l.b16 %v146
    %v266 = vunpack.c.h.b16 %v146
    %v267 = vunpack.c.l.b16 %v147
    %v268 = vunpack.c.h.b16 %v147
    %v269 = vunpack.c.l.b16 %v148
    %v270 = vunpack.c.h.b16 %v148
    %v271 = vunpack.c.l.b16 %v149
    %v272 = vunpack.c.h.b16 %v149
    %v273 = vunpack.c.l.b16 %v150
    %v274 = vunpack.c.h.b16 %v150
    %v275 = vunpack.c.l.b16 %v151
    %v276 = vunpack.c.h.b16 %v151
    %v277 = vunpack.c.l.b16 %v152
    %v278 = vunpack.c.h.b16 %v152
    %v279 = vunpack.c.l.b16 %v153
    %v280 = vunpack.c.h.b16 %v153
    %v281 = vunpack.c.l.b16 %v154
    %v282 = vunpack.c.h.b16 %v154
    %v283 = vunpack.c.l.b16 %v155
    %v284 = vunpack.c.h.b16 %v155
    %v285 = vunpack.c.l.b16 %v156
    %v286 = vunpack.c.h.b16 %v156
    %v287 = vunpack.c.l.b16 %v157
    %v288 = vunpack.c.h.b16 %v157
    %v289 = vunpack.c.l.b16 %v158
    %v290 = vunpack.c.h.b16 %v158
    %v291 = vunpack.c.l.b16 %v159
    %v292 = vunpack.c.h.b16 %v159
    %v293 = vunpack.c.l.b16 %v160
    %v294 = vunpack.c.h.b16 %v160
    %v295 = vunpack.c.l.b16 %v161
    %v296 = vunpack.c.h.b16 %v161
    %v297 = vunpack.c.l.b16 %v162
    %v298 = vunpack.c.h.b16 %v162
    %v299 = vunpack.c.l.b16 %v163
    %v300 = vunpack.c.h.b16 %v163
    %v301 = vunpack.c.l.b16 %v164
    %v302 = vunpack.c.h.b16 %v164
    %v303 = vunpack.c.l.b16 %v165
    %v304 = vunpack.c.h.b16 %v165
    %v305 = vunpack.c.l.b16 %v166
    %v306 = vunpack.c.h.b16 %v166
    %v307 = vunpack.c.l.b16 %v167
    %v308 = vunpack.c.h.b16 %v167
    %v309 = vunpack.c.l.b16 %v168
    %v310 = vunpack.c.h.b16 %v168
    %v311 = vunpack.c.l.b16 %v169
    %v312 = vunpack.c.h.b16 %v169
    %v313 = vunpack.c.l.b16 %v170
    %v314 = vunpack.c.h.b16 %v170
    %v315 = vunpack.c.l.b16 %v171
    %v316 = vunpack.c.h.b16 %v171
    %v317 = vunpack.c.l.b16 %v172
    %v318 = vunpack.c.h.b16 %v172
    %v319 = vunpack.c.l.b16 %v173
    %v320 = vunpack.c.h.b16 %v173
    %v321 = vunpack.c.l.b16 %v174
    %v322 = vunpack.c.h.b16 %v174
    %v323 = vunpack.c.l.b16 %v175
    %v324 = vunpack.c.h.b16 %v175
    %v325 = vunpack.c.l.b16 %v176
    %v326 = vunpack.c.h.b16 %v176
    %v327 = vunpack.c.l.b16 %v177
    %v328 = vunpack.c.h.b16 %v177
    %v329 = vunpack.c.l.b16 %v178
    %v330 = vunpack.c.h.b16 %v178
    %v331 = vunpack.c.l.b16 %v179
    %v332 = vunpack.c.h.b16 %v179
    %v333 = vunpack.c.l.b16 %v180
    %v334 = vunpack.c.h.b16 %v180
    %v335 = vpack.c.b16 %v267, %v263
    %v336 = vpack.c.b16 %v268, %v264
    %v337 = vpack.c.b16 %v269, %v265
    %v338 = vpack.c.b16 %v270, %v266
    %v339 = vpack.c.b16 %v275, %v271
    %v340 = vpack.c.b16 %v276, %v272
    %v341 = vpack.c.b16 %v277, %v273
    %v342 = vpack.c.b16 %v278, %v274
    %v343 = vpack.c.b16 %v283, %v279
    %v344 = vpack.c.b16 %v284, %v280
    %v345 = vpack.c.b16 %v285, %v281
    %v346 = vpack.c.b16 %v286, %v282
    %v347 = vpack.c.b16 %v291, %v287
    %v348 = vpack.c.b16 %v292, %v288
    %v349 = vpack.c.b16 %v293, %v289
    %v350 = vpack.c.b16 %v294, %v290
    %v351 = vpack.c.b16 %v299, %v295
    %v352 = vpack.c.b16 %v300, %v296
    %v353 = vpack.c.b16 %v301, %v297
    %v354 = vpack.c.b16 %v302, %v298
    %v355 = vpack.c.b16 %v307, %v303
    %v356 = vpack.c.b16 %v308, %v304
    %v357 = vpack.c.b16 %v309, %v305
    %v358 = vpack.c.b16 %v310, %v306
    %v359 = vpack.c.b16 %v315, %v311
    %v360 = vpack.c.b16 %v316, %v312
    %v361 = vpack.c.b16 %v317, %v313
    %v362 = vpack.c.b16 %v318, %v314
    %v363 = vpack.c.b16 %v323, %v319
    %v364 = vpack.c.b16 %v324, %v320
    %v365 = vpack.c.b16 %v325, %v321
    %v366 = vpack.c.b16 %v326, %v322
    %v367 = vpack.c.b16 %v331, %v327
    %v368 = vpack.c.b16 %v332, %v328
    %v369 = vpack.c.b16 %v333, %v329
    %v370 = vpack.c.b16 %v334, %v330
    %vm407 = vcmask 130048
    %v409 = vsel %vm407, %v216, 0
    %v412 = vsel %vm407, %v218, 0
    %v415 = vsel %vm407, %v220, 0
    %v418 = vsel %vm407, %v222, 0
    %420 = vmatpush.bf16.msra.mxu0 %v363
    %421 = vmatpush.bf16.msra.mxu0 %v359
    %422 = vmatpush.bf16.msra.mxu0 %v355
    %423 = vmatpush.bf16.msra.mxu0 %v351
    %424 = vmatpush.bf16.msra.mxu0 %v347
    %425 = vmatpush.bf16.msra.mxu0 %v343
    %426 = vmatpush.bf16.msra.mxu0 %v339
    %427 = vmatpush.bf16.msra.mxu0 %v335
    %428 = vmatmul.bf16.gmra.mxu0 %v215
    %v429 = vpop.f32.mrf.mxu0
    %v430 = vadd.f32 %v183, %v429
    %v431 = vpop.f32.mrf.mxu0
    %v432 = vadd.f32 %v183, %v431
    %433 = vmatmul.bf16.gmra.mxu0 %v217
    %v434 = vpop.f32.mrf.mxu0
    %v435 = vadd.f32 %v183, %v434
    %v436 = vpop.f32.mrf.mxu0
    %v437 = vadd.f32 %v183, %v436
    %438 = vmatmul.bf16.gmra.mxu0 %v219
    %v439 = vpop.f32.mrf.mxu0
    %v440 = vadd.f32 %v183, %v439
    %v441 = vpop.f32.mrf.mxu0
    %v442 = vadd.f32 %v183, %v441
    %443 = vmatmul.bf16.gmra.mxu0 %v221
    %v444 = vpop.f32.mrf.mxu0
    %v445 = vadd.f32 %v183, %v444
    %v446 = vpop.f32.mrf.mxu0
    %v447 = vadd.f32 %v183, %v446
    %448 = vdwg.mxu0
    %449 = vmatpush.bf16.msra.mxu0 0
    %450 = vmatpush.bf16.msra.mxu0 0
    %451 = vmatpush.bf16.msra.mxu0 0
    %452 = vmatpush.bf16.msra.mxu0 0
    %453 = vmatpush.bf16.msra.mxu0 0
    %454 = vmatpush.bf16.msra.mxu0 0
    %455 = vmatpush.bf16.msra.mxu0 0
    %456 = vmatpush.bf16.msra.mxu0 %v367
    %457 = vmatmul.bf16.gmra.mxu0 %v409
    %v458 = vpop.f32.mrf.mxu0
    %v459 = vadd.f32 %v430, %v458
    %v460 = vpop.f32.mrf.mxu0
    %v461 = vadd.f32 %v432, %v460
    %462 = vmatmul.bf16.gmra.mxu0 %v412
    %v463 = vpop.f32.mrf.mxu0
    %v464 = vadd.f32 %v435, %v463
    %v465 = vpop.f32.mrf.mxu0
    %v466 = vadd.f32 %v437, %v465
    %467 = vmatmul.bf16.gmra.mxu0 %v415
    %v468 = vpop.f32.mrf.mxu0
    %v469 = vadd.f32 %v440, %v468
    %v470 = vpop.f32.mrf.mxu0
    %v471 = vadd.f32 %v442, %v470
    %472 = vmatmul.bf16.gmra.mxu0 %v418
    %v473 = vpop.f32.mrf.mxu0
    %v474 = vadd.f32 %v445, %v473
    %v475 = vpop.f32.mrf.mxu0
    %v476 = vadd.f32 %v447, %v475
    %477 = vdwg.mxu0
    %478 = vmatpush.bf16.msra.mxu0 %v364
    %479 = vmatpush.bf16.msra.mxu0 %v360
    %480 = vmatpush.bf16.msra.mxu0 %v356
    %481 = vmatpush.bf16.msra.mxu0 %v352
    %482 = vmatpush.bf16.msra.mxu0 %v348
    %483 = vmatpush.bf16.msra.mxu0 %v344
    %484 = vmatpush.bf16.msra.mxu0 %v340
    %485 = vmatpush.bf16.msra.mxu0 %v336
    %486 = vmatmul.bf16.gmra.mxu0 %v215
    %v487 = vpop.f32.mrf.mxu0
    %v488 = vadd.f32 %v184, %v487
    %v489 = vpop.f32.mrf.mxu0
    %v490 = vadd.f32 %v184, %v489
    %491 = vmatmul.bf16.gmra.mxu0 %v217
    %v492 = vpop.f32.mrf.mxu0
    %v493 = vadd.f32 %v184, %v492
    %v494 = vpop.f32.mrf.mxu0
    %v495 = vadd.f32 %v184, %v494
    %496 = vmatmul.bf16.gmra.mxu0 %v219
    %v497 = vpop.f32.mrf.mxu0
    %v498 = vadd.f32 %v184, %v497
    %v499 = vpop.f32.mrf.mxu0
    %v500 = vadd.f32 %v184, %v499
    %501 = vmatmul.bf16.gmra.mxu0 %v221
    %v502 = vpop.f32.mrf.mxu0
    %v503 = vadd.f32 %v184, %v502
    %v504 = vpop.f32.mrf.mxu0
    %v505 = vadd.f32 %v184, %v504
    %506 = vdwg.mxu0
    %507 = vmatpush.bf16.msra.mxu0 0
    %508 = vmatpush.bf16.msra.mxu0 0
    %509 = vmatpush.bf16.msra.mxu0 0
    %510 = vmatpush.bf16.msra.mxu0 0
    %511 = vmatpush.bf16.msra.mxu0 0
    %512 = vmatpush.bf16.msra.mxu0 0
    %513 = vmatpush.bf16.msra.mxu0 0
    %514 = vmatpush.bf16.msra.mxu0 %v368
    %515 = vmatmul.bf16.gmra.mxu0 %v409
    %v516 = vpop.f32.mrf.mxu0
    %v517 = vadd.f32 %v488, %v516
    %v518 = vpop.f32.mrf.mxu0
    %v519 = vadd.f32 %v490, %v518
    %520 = vmatmul.bf16.gmra.mxu0 %v412
    %v521 = vpop.f32.mrf.mxu0
    %v522 = vadd.f32 %v493, %v521
    %v523 = vpop.f32.mrf.mxu0
    %v524 = vadd.f32 %v495, %v523
    %525 = vmatmul.bf16.gmra.mxu0 %v415
    %v526 = vpop.f32.mrf.mxu0
    %v527 = vadd.f32 %v498, %v526
    %v528 = vpop.f32.mrf.mxu0
    %v529 = vadd.f32 %v500, %v528
    %530 = vmatmul.bf16.gmra.mxu0 %v418
    %v531 = vpop.f32.mrf.mxu0
    %v532 = vadd.f32 %v503, %v531
    %v533 = vpop.f32.mrf.mxu0
    %v534 = vadd.f32 %v505, %v533
    %535 = vdwg.mxu0
    %536 = vmatpush.bf16.msra.mxu0 %v365
    %537 = vmatpush.bf16.msra.mxu0 %v361
    %538 = vmatpush.bf16.msra.mxu0 %v357
    %539 = vmatpush.bf16.msra.mxu0 %v353
    %540 = vmatpush.bf16.msra.mxu0 %v349
    %541 = vmatpush.bf16.msra.mxu0 %v345
    %542 = vmatpush.bf16.msra.mxu0 %v341
    %543 = vmatpush.bf16.msra.mxu0 %v337
    %544 = vmatmul.bf16.gmra.mxu0 %v215
    %v545 = vpop.f32.mrf.mxu0
    %v546 = vadd.f32 %v185, %v545
    %v547 = vpop.f32.mrf.mxu0
    %v548 = vadd.f32 %v185, %v547
    %549 = vmatmul.bf16.gmra.mxu0 %v217
    %v550 = vpop.f32.mrf.mxu0
    %v551 = vadd.f32 %v185, %v550
    %v552 = vpop.f32.mrf.mxu0
    %v553 = vadd.f32 %v185, %v552
    %554 = vmatmul.bf16.gmra.mxu0 %v219
    %v555 = vpop.f32.mrf.mxu0
    %v556 = vadd.f32 %v185, %v555
    %v557 = vpop.f32.mrf.mxu0
    %v558 = vadd.f32 %v185, %v557
    %559 = vmatmul.bf16.gmra.mxu0 %v221
    %v560 = vpop.f32.mrf.mxu0
    %v561 = vadd.f32 %v185, %v560
    %v562 = vpop.f32.mrf.mxu0
    %v563 = vadd.f32 %v185, %v562
    %564 = vdwg.mxu0
    %565 = vmatpush.bf16.msra.mxu0 0
    %566 = vmatpush.bf16.msra.mxu0 0
    %567 = vmatpush.bf16.msra.mxu0 0
    %568 = vmatpush.bf16.msra.mxu0 0
    %569 = vmatpush.bf16.msra.mxu0 0
    %570 = vmatpush.bf16.msra.mxu0 0
    %571 = vmatpush.bf16.msra.mxu0 0
    %572 = vmatpush.bf16.msra.mxu0 %v369
    %573 = vmatmul.bf16.gmra.mxu0 %v409
    %v574 = vpop.f32.mrf.mxu0
    %v575 = vadd.f32 %v546, %v574
    %v576 = vpop.f32.mrf.mxu0
    %v577 = vadd.f32 %v548, %v576
    %578 = vmatmul.bf16.gmra.mxu0 %v412
    %v579 = vpop.f32.mrf.mxu0
    %v580 = vadd.f32 %v551, %v579
    %v581 = vpop.f32.mrf.mxu0
    %v582 = vadd.f32 %v553, %v581
    %583 = vmatmul.bf16.gmra.mxu0 %v415
    %v584 = vpop.f32.mrf.mxu0
    %v585 = vadd.f32 %v556, %v584
    %v586 = vpop.f32.mrf.mxu0
    %v587 = vadd.f32 %v558, %v586
    %588 = vmatmul.bf16.gmra.mxu0 %v418
    %v589 = vpop.f32.mrf.mxu0
    %v590 = vadd.f32 %v561, %v589
    %v591 = vpop.f32.mrf.mxu0
    %v592 = vadd.f32 %v563, %v591
    %593 = vdwg.mxu0
    %594 = vmatpush.bf16.msra.mxu0 %v366
    %595 = vmatpush.bf16.msra.mxu0 %v362
    %596 = vmatpush.bf16.msra.mxu0 %v358
    %597 = vmatpush.bf16.msra.mxu0 %v354
    %598 = vmatpush.bf16.msra.mxu0 %v350
    %599 = vmatpush.bf16.msra.mxu0 %v346
    %600 = vmatpush.bf16.msra.mxu0 %v342
    %601 = vmatpush.bf16.msra.mxu0 %v338
    %602 = vmatmul.bf16.gmra.mxu0 %v215
    %v603 = vpop.f32.mrf.mxu0
    %v604 = vadd.f32 %v186, %v603
    %v605 = vpop.f32.mrf.mxu0
    %v606 = vadd.f32 %v186, %v605
    %607 = vmatmul.bf16.gmra.mxu0 %v217
    %v608 = vpop.f32.mrf.mxu0
    %v609 = vadd.f32 %v186, %v608
    %v610 = vpop.f32.mrf.mxu0
    %v611 = vadd.f32 %v186, %v610
    %612 = vmatmul.bf16.gmra.mxu0 %v219
    %v613 = vpop.f32.mrf.mxu0
    %v614 = vadd.f32 %v186, %v613
    %v615 = vpop.f32.mrf.mxu0
    %v616 = vadd.f32 %v186, %v615
    %617 = vmatmul.bf16.gmra.mxu0 %v221
    %v618 = vpop.f32.mrf.mxu0
    %v619 = vadd.f32 %v186, %v618
    %v620 = vpop.f32.mrf.mxu0
    %v621 = vadd.f32 %v186, %v620
    %622 = vdwg.mxu0
    %623 = vmatpush.bf16.msra.mxu0 0
    %624 = vmatpush.bf16.msra.mxu0 0
    %625 = vmatpush.bf16.msra.mxu0 0
    %626 = vmatpush.bf16.msra.mxu0 0
    %627 = vmatpush.bf16.msra.mxu0 0
    %628 = vmatpush.bf16.msra.mxu0 0
    %629 = vmatpush.bf16.msra.mxu0 0
    %630 = vmatpush.bf16.msra.mxu0 %v370
    %631 = vmatmul.bf16.gmra.mxu0 %v409
    %v632 = vpop.f32.mrf.mxu0
    %v633 = vadd.f32 %v604, %v632
    %v634 = vpop.f32.mrf.mxu0
    %v635 = vadd.f32 %v606, %v634
    %636 = vmatmul.bf16.gmra.mxu0 %v412
    %v637 = vpop.f32.mrf.mxu0
    %v638 = vadd.f32 %v609, %v637
    %v639 = vpop.f32.mrf.mxu0
    %v640 = vadd.f32 %v611, %v639
    %641 = vmatmul.bf16.gmra.mxu0 %v415
    %v642 = vpop.f32.mrf.mxu0
    %v643 = vadd.f32 %v614, %v642
    %v644 = vpop.f32.mrf.mxu0
    %v645 = vadd.f32 %v616, %v644
    %646 = vmatmul.bf16.gmra.mxu0 %v418
    %v647 = vpop.f32.mrf.mxu0
    %v648 = vadd.f32 %v619, %v647
    %v649 = vpop.f32.mrf.mxu0
    %v650 = vadd.f32 %v621, %v649
    %651 = vdwg.mxu0
    %652 = vst [vmem:[#allocation2] sm:$0xff] %v459
    %653 = vst [vmem:[#allocation2 + $0x8] sm:$0xff] %v517
    %654 = vst [vmem:[#allocation2 + $0x10] sm:$0xff] %v575
    %655 = vst [vmem:[#allocation2 + $0x18] sm:$0xff] %v633
    %656 = vst [vmem:[#allocation2 + $0x20] sm:$0xff] %v461
    %657 = vst [vmem:[#allocation2 + $0x28] sm:$0xff] %v519
    %658 = vst [vmem:[#allocation2 + $0x30] sm:$0xff] %v577
    %659 = vst [vmem:[#allocation2 + $0x38] sm:$0xff] %v635
    %660 = vst [vmem:[#allocation2 + $0x40] sm:$0xff] %v464
    %661 = vst [vmem:[#allocation2 + $0x48] sm:$0xff] %v522
    %662 = vst [vmem:[#allocation2 + $0x50] sm:$0xff] %v580
    %663 = vst [vmem:[#allocation2 + $0x58] sm:$0xff] %v638
    %664 = vst [vmem:[#allocation2 + $0x60] sm:$0xff] %v466
    %665 = vst [vmem:[#allocation2 + $0x68] sm:$0xff] %v524
    %666 = vst [vmem:[#allocation2 + $0x70] sm:$0xff] %v582
    %667 = vst [vmem:[#allocation2 + $0x78] sm:$0xff] %v640
    %668 = vst [vmem:[#allocation2 + $0x80] sm:$0xff] %v469
    %669 = vst [vmem:[#allocation2 + $0x88] sm:$0xff] %v527
    %670 = vst [vmem:[#allocation2 + $0x90] sm:$0xff] %v585
    %671 = vst [vmem:[#allocation2 + $0x98] sm:$0xff] %v643
    %672 = vst [vmem:[#allocation2 + $0xa0] sm:$0xff] %v471
    %673 = vst [vmem:[#allocation2 + $0xa8] sm:$0xff] %v529
    %674 = vst [vmem:[#allocation2 + $0xb0] sm:$0xff] %v587
    %675 = vst [vmem:[#allocation2 + $0xb8] sm:$0xff] %v645
    %676 = vst [vmem:[#allocation2 + $0xc0] sm:$0xff] %v474
    %677 = vst [vmem:[#allocation2 + $0xc8] sm:$0xff] %v532
    %678 = vst [vmem:[#allocation2 + $0xd0] sm:$0xff] %v590
    %679 = vst [vmem:[#allocation2 + $0xd8] sm:$0xff] %v648
    %680 = vst [vmem:[#allocation2 + $0xe0] sm:$0xff] %v476
    %681 = vst [vmem:[#allocation2 + $0xe8] sm:$0xff] %v534
    %682 = vst [vmem:[#allocation2 + $0xf0] sm:$0xff] %v592
    %683 = vst [vmem:[#allocation2 + $0xf8] sm:$0xff] %v650
    %s684 = smul.u32 0, 4
    %s685 = smul.addr %s684, 8
    %s686 = scalar_lea.vmem [#allocation2], %s685
    %v687 = vld [vmem:[%s686] sm:$0xff]
    %v688 = vld [vmem:[%s686 + $0x8] sm:$0xff]
    %v689 = vld [vmem:[%s686 + $0x10] sm:$0xff]
    %v690 = vld [vmem:[%s686 + $0x18] sm:$0xff]
    %v691 = vld [vmem:[#allocation9] sm:$0xff]
    %v692 = vld [vmem:[#allocation9 + $0x8] sm:$0xff]
    %v693 = vld [vmem:[#allocation9 + $0x10] sm:$0xff]
    %v694 = vld [vmem:[#allocation9 + $0x18] sm:$0xff]
    %v695 = vld [vmem:[#allocation9 + $0x20] sm:$0xff]
    %v696 = vld [vmem:[#allocation9 + $0x28] sm:$0xff]
    %v697 = vld [vmem:[#allocation9 + $0x30] sm:$0xff]
    %v698 = vld [vmem:[#allocation9 + $0x38] sm:$0xff]
    %v699 = vld [vmem:[#allocation9 + $0x40] sm:$0xff]
    %v700 = vld [vmem:[#allocation9 + $0x48] sm:$0xff]
    %v701 = vld [vmem:[#allocation9 + $0x50] sm:$0xff]
    %v702 = vld [vmem:[#allocation9 + $0x58] sm:$0xff]
    %v703 = vld [vmem:[#allocation9 + $0x60] sm:$0xff]
    %v704 = vld [vmem:[#allocation9 + $0x68] sm:$0xff]
    %v705 = vld [vmem:[#allocation9 + $0x70] sm:$0xff]
    %v706 = vld [vmem:[#allocation9 + $0x78] sm:$0xff]
    %v707 = vld [vmem:[#allocation9 + $0x80] sm:$0xff]
    %v708 = vld [vmem:[#allocation9 + $0x88] sm:$0xff]
    %v709 = vld [vmem:[#allocation9 + $0x90] sm:$0xff]
    %v710 = vld [vmem:[#allocation9 + $0x98] sm:$0xff]
    %v711 = vld [vmem:[#allocation9 + $0xa0] sm:$0xff]
    %v712 = vld [vmem:[#allocation9 + $0xa8] sm:$0xff]
    %v713 = vld [vmem:[#allocation9 + $0xb0] sm:$0xff]
    %v714 = vld [vmem:[#allocation9 + $0xb8] sm:$0xff]
    %v715 = vld [vmem:[#allocation9 + $0xc0] sm:$0xff]
    %v716 = vld [vmem:[#allocation9 + $0xc8] sm:$0xff]
    %v717 = vld [vmem:[#allocation9 + $0xd0] sm:$0xff]
    %v718 = vld [vmem:[#allocation9 + $0xd8] sm:$0xff]
    %v719 = vld [vmem:[#allocation9 + $0xe0] sm:$0xff]
    %v720 = vld [vmem:[#allocation9 + $0xe8] sm:$0xff]
    %v721 = vld [vmem:[#allocation9 + $0xf0] sm:$0xff]
    %v722 = vld [vmem:[#allocation9 + $0xf8] sm:$0xff]
    %v755 = vunpack.c.l.b16 %v691
    %v756 = vunpack.c.h.b16 %v691
    %v757 = vunpack.c.l.b16 %v692
    %v758 = vunpack.c.h.b16 %v692
    %v759 = vunpack.c.l.b16 %v693
    %v760 = vunpack.c.h.b16 %v693
    %v761 = vunpack.c.l.b16 %v694
    %v762 = vunpack.c.h.b16 %v694
    %v763 = vunpack.c.l.b16 %v695
    %v764 = vunpack.c.h.b16 %v695
    %v765 = vunpack.c.l.b16 %v696
    %v766 = vunpack.c.h.b16 %v696
    %v767 = vunpack.c.l.b16 %v697
    %v768 = vunpack.c.h.b16 %v697
    %v769 = vunpack.c.l.b16 %v698
    %v770 = vunpack.c.h.b16 %v698
    %v771 = vunpack.c.l.b16 %v699
    %v772 = vunpack.c.h.b16 %v699
    %v773 = vunpack.c.l.b16 %v700
    %v774 = vunpack.c.h.b16 %v700
    %v775 = vunpack.c.l.b16 %v701
    %v776 = vunpack.c.h.b16 %v701
    %v777 = vunpack.c.l.b16 %v702
    %v778 = vunpack.c.h.b16 %v702
    %v779 = vunpack.c.l.b16 %v703
    %v780 = vunpack.c.h.b16 %v703
    %v781 = vunpack.c.l.b16 %v704
    %v782 = vunpack.c.h.b16 %v704
    %v783 = vunpack.c.l.b16 %v705
    %v784 = vunpack.c.h.b16 %v705
    %v785 = vunpack.c.l.b16 %v706
    %v786 = vunpack.c.h.b16 %v706
    %v787 = vunpack.c.l.b16 %v707
    %v788 = vunpack.c.h.b16 %v707
    %v789 = vunpack.c.l.b16 %v708
    %v790 = vunpack.c.h.b16 %v708
    %v791 = vunpack.c.l.b16 %v709
    %v792 = vunpack.c.h.b16 %v709
    %v793 = vunpack.c.l.b16 %v710
    %v794 = vunpack.c.h.b16 %v710
    %v795 = vunpack.c.l.b16 %v711
    %v796 = vunpack.c.h.b16 %v711
    %v797 = vunpack.c.l.b16 %v712
    %v798 = vunpack.c.h.b16 %v712
    %v799 = vunpack.c.l.b16 %v713
    %v800 = vunpack.c.h.b16 %v713
    %v801 = vunpack.c.l.b16 %v714
    %v802 = vunpack.c.h.b16 %v714
    %v803 = vunpack.c.l.b16 %v715
    %v804 = vunpack.c.h.b16 %v715
    %v805 = vunpack.c.l.b16 %v716
    %v806 = vunpack.c.h.b16 %v716
    %v807 = vunpack.c.l.b16 %v717
    %v808 = vunpack.c.h.b16 %v717
    %v809 = vunpack.c.l.b16 %v718
    %v810 = vunpack.c.h.b16 %v718
    %v811 = vunpack.c.l.b16 %v719
    %v812 = vunpack.c.h.b16 %v719
    %v813 = vunpack.c.l.b16 %v720
    %v814 = vunpack.c.h.b16 %v720
    %v815 = vunpack.c.l.b16 %v721
    %v816 = vunpack.c.h.b16 %v721
    %v817 = vunpack.c.l.b16 %v722
    %v818 = vunpack.c.h.b16 %v722
    %v819 = vpack.c.b16 %v759, %v755
    %v820 = vpack.c.b16 %v760, %v756
    %v821 = vpack.c.b16 %v761, %v757
    %v822 = vpack.c.b16 %v762, %v758
    %v823 = vpack.c.b16 %v767, %v763
    %v824 = vpack.c.b16 %v768, %v764
    %v825 = vpack.c.b16 %v769, %v765
    %v826 = vpack.c.b16 %v770, %v766
    %v827 = vpack.c.b16 %v775, %v771
    %v828 = vpack.c.b16 %v776, %v772
    %v829 = vpack.c.b16 %v777, %v773
    %v830 = vpack.c.b16 %v778, %v774
    %v831 = vpack.c.b16 %v783, %v779
    %v832 = vpack.c.b16 %v784, %v780
    %v833 = vpack.c.b16 %v785, %v781
    %v834 = vpack.c.b16 %v786, %v782
    %v835 = vpack.c.b16 %v791, %v787
    %v836 = vpack.c.b16 %v792, %v788
    %v837 = vpack.c.b16 %v793, %v789
    %v838 = vpack.c.b16 %v794, %v790
    %v839 = vpack.c.b16 %v799, %v795
    %v840 = vpack.c.b16 %v800, %v796
    %v841 = vpack.c.b16 %v801, %v797
    %v842 = vpack.c.b16 %v802, %v798
    %v843 = vpack.c.b16 %v807, %v803
    %v844 = vpack.c.b16 %v808, %v804
    %v845 = vpack.c.b16 %v809, %v805
    %v846 = vpack.c.b16 %v810, %v806
    %v847 = vpack.c.b16 %v815, %v811
    %v848 = vpack.c.b16 %v816, %v812
    %v849 = vpack.c.b16 %v817, %v813
    %v850 = vpack.c.b16 %v818, %v814
    %883 = vmatpush.bf16.msra.mxu0 %v847
    %884 = vmatpush.bf16.msra.mxu0 %v843
    %885 = vmatpush.bf16.msra.mxu0 %v839
    %886 = vmatpush.bf16.msra.mxu0 %v835
    %887 = vmatpush.bf16.msra.mxu0 %v831
    %888 = vmatpush.bf16.msra.mxu0 %v827
    %889 = vmatpush.bf16.msra.mxu0 %v823
    %890 = vmatpush.bf16.msra.mxu0 %v819
    %891 = vmatmul.bf16.gmra.mxu0 0
    %v892 = vpop.f32.mrf.mxu0
    %v893 = vadd.f32 0.0, %v892
    %v894 = vpop.f32.mrf.mxu0
    %895 = vdwg.mxu0
    %896 = vmatpush.bf16.msra.mxu0 %v848
    %897 = vmatpush.bf16.msra.mxu0 %v844
    %898 = vmatpush.bf16.msra.mxu0 %v840
    %899 = vmatpush.bf16.msra.mxu0 %v836
    %900 = vmatpush.bf16.msra.mxu0 %v832
    %901 = vmatpush.bf16.msra.mxu0 %v828
    %902 = vmatpush.bf16.msra.mxu0 %v824
    %903 = vmatpush.bf16.msra.mxu0 %v820
    %904 = vmatmul.bf16.gmra.mxu0 0
    %v905 = vpop.f32.mrf.mxu0
    %v906 = vadd.f32 0.0, %v905
    %v907 = vpop.f32.mrf.mxu0
    %908 = vdwg.mxu0
    %909 = vmatpush.bf16.msra.mxu0 %v849
    %910 = vmatpush.bf16.msra.mxu0 %v845
    %911 = vmatpush.bf16.msra.mxu0 %v841
    %912 = vmatpush.bf16.msra.mxu0 %v837
    %913 = vmatpush.bf16.msra.mxu0 %v833
    %914 = vmatpush.bf16.msra.mxu0 %v829
    %915 = vmatpush.bf16.msra.mxu0 %v825
    %916 = vmatpush.bf16.msra.mxu0 %v821
    %917 = vmatmul.bf16.gmra.mxu0 0
    %v918 = vpop.f32.mrf.mxu0
    %v919 = vadd.f32 0.0, %v918
    %v920 = vpop.f32.mrf.mxu0
    %921 = vdwg.mxu0
    %922 = vmatpush.bf16.msra.mxu0 %v850
    %923 = vmatpush.bf16.msra.mxu0 %v846
    %924 = vmatpush.bf16.msra.mxu0 %v842
    %925 = vmatpush.bf16.msra.mxu0 %v838
    %926 = vmatpush.bf16.msra.mxu0 %v834
    %927 = vmatpush.bf16.msra.mxu0 %v830
    %928 = vmatpush.bf16.msra.mxu0 %v826
    %929 = vmatpush.bf16.msra.mxu0 %v822
    %930 = vmatmul.bf16.gmra.mxu0 0
    %v931 = vpop.f32.mrf.mxu0
    %v932 = vadd.f32 0.0, %v931
    %v933 = vpop.f32.mrf.mxu0
    %934 = vdwg.mxu0
    %v935 = vadd.f32 %v687, %v893
    %v936 = vadd.f32 %v688, %v906
    %v937 = vadd.f32 %v689, %v919
    %v938 = vadd.f32 %v690, %v932
    %v939 = vmul.f32 %v935, 0.5
    %v940 = vtanh.pop %v939
    %v941 = vmul.f32 %v940, 0.5
    %v942 = vadd.f32 %v941, 0.5
    %v943 = vmul.f32 %v936, 0.5
    %v944 = vtanh.pop %v943
    %v945 = vmul.f32 %v944, 0.5
    %v946 = vadd.f32 %v945, 0.5
    %v947 = vtanh.pop %v937
    %v948 = vmul.f32 %v938, 0.5
    %v949 = vtanh.pop %v948
    %v950 = vmul.f32 %v949, 0.5
    %v951 = vadd.f32 %v950, 0.5
    %v952 = vmul.f32 %v946, 0.0
    %v953 = vmul.f32 %v942, %v947
    %v954 = vadd.f32 %v952, %v953
    %v955 = vtanh.pop %v954
    %v956 = vmul.f32 %v951, %v955
    %s957 = smul.u32 1, 4
    %s958 = smul.addr %s957, 8
    %s959 = scalar_lea.vmem [#allocation2], %s958
    %v960 = vld [vmem:[%s959] sm:$0xff]
    %v961 = vld [vmem:[%s959 + $0x8] sm:$0xff]
    %v962 = vld [vmem:[%s959 + $0x10] sm:$0xff]
    %v963 = vld [vmem:[%s959 + $0x18] sm:$0xff]
    %v964 = vpack.c.bf16 %v956, %v956
    %965 = vmatpush.bf16.msra.mxu0 %v847
    %966 = vmatpush.bf16.msra.mxu0 %v843
    %967 = vmatpush.bf16.msra.mxu0 %v839
    %968 = vmatpush.bf16.msra.mxu0 %v835
    %969 = vmatpush.bf16.msra.mxu0 %v831
    %970 = vmatpush.bf16.msra.mxu0 %v827
    %971 = vmatpush.bf16.msra.mxu0 %v823
    %972 = vmatpush.bf16.msra.mxu0 %v819
    %973 = vmatmul.bf16.gmra.mxu0 %v964
    %v974 = vpop.f32.mrf.mxu0
    %v975 = vadd.f32 0.0, %v974
    %v976 = vpop.f32.mrf.mxu0
    %977 = vdwg.mxu0
    %978 = vmatpush.bf16.msra.mxu0 %v848
    %979 = vmatpush.bf16.msra.mxu0 %v844
    %980 = vmatpush.bf16.msra.mxu0 %v840
    %981 = vmatpush.bf16.msra.mxu0 %v836
    %982 = vmatpush.bf16.msra.mxu0 %v832
    %983 = vmatpush.bf16.msra.mxu0 %v828
    %984 = vmatpush.bf16.msra.mxu0 %v824
    %985 = vmatpush.bf16.msra.mxu0 %v820
    %986 = vmatmul.bf16.gmra.mxu0 %v964
    %v987 = vpop.f32.mrf.mxu0
    %v988 = vadd.f32 0.0, %v987
    %v989 = vpop.f32.mrf.mxu0
    %990 = vdwg.mxu0
    %991 = vmatpush.bf16.msra.mxu0 %v849
    %992 = vmatpush.bf16.msra.mxu0 %v845
    %993 = vmatpush.bf16.msra.mxu0 %v841
    %994 = vmatpush.bf16.msra.mxu0 %v837
    %995 = vmatpush.bf16.msra.mxu0 %v833
    %996 = vmatpush.bf16.msra.mxu0 %v829
    %997 = vmatpush.bf16.msra.mxu0 %v825
    %998 = vmatpush.bf16.msra.mxu0 %v821
    %999 = vmatmul.bf16.gmra.mxu0 %v964
    %v1000 = vpop.f32.mrf.mxu0
    %v1001 = vadd.f32 0.0, %v1000
    %v1002 = vpop.f32.mrf.mxu0
    %1003 = vdwg.mxu0
    %1004 = vmatpush.bf16.msra.mxu0 %v850
    %1005 = vmatpush.bf16.msra.mxu0 %v846
    %1006 = vmatpush.bf16.msra.mxu0 %v842
    %1007 = vmatpush.bf16.msra.mxu0 %v838
    %1008 = vmatpush.bf16.msra.mxu0 %v834
    %1009 = vmatpush.bf16.msra.mxu0 %v830
    %1010 = vmatpush.bf16.msra.mxu0 %v826
    %1011 = vmatpush.bf16.msra.mxu0 %v822
    %1012 = vmatmul.bf16.gmra.mxu0 %v964
    %v1013 = vpop.f32.mrf.mxu0
    %v1014 = vadd.f32 0.0, %v1013
    %v1015 = vpop.f32.mrf.mxu0
    %1016 = vdwg.mxu0
    %v1017 = vadd.f32 %v960, %v975
    %v1018 = vadd.f32 %v961, %v988
    %v1019 = vadd.f32 %v962, %v1001
    %v1020 = vadd.f32 %v963, %v1014
    %v1021 = vmul.f32 %v1017, 0.5
    %v1022 = vtanh.pop %v1021
    %v1023 = vmul.f32 %v1022, 0.5
    %v1024 = vadd.f32 %v1023, 0.5
    %v1025 = vmul.f32 %v1018, 0.5
    %v1026 = vtanh.pop %v1025
    %v1027 = vmul.f32 %v1026, 0.5
    %v1028 = vadd.f32 %v1027, 0.5
    %v1029 = vtanh.pop %v1019
    %v1030 = vmul.f32 %v1020, 0.5
    %v1031 = vtanh.pop %v1030
    %v1032 = vmul.f32 %v1031, 0.5
    %v1033 = vadd.f32 %v1032, 0.5
    %v1034 = vmul.f32 %v1028, %v954
    %v1035 = vmul.f32 %v1024, %v1029
    %v1036 = vadd.f32 %v1034, %v1035
    %v1037 = vtanh.pop %v1036
    %v1038 = vmul.f32 %v1033, %v1037
    %s1039 = smul.u32 2, 4
    %s1040 = smul.addr %s1039, 8
    %s1041 = scalar_lea.vmem [#allocation2], %s1040
    %v1042 = vld [vmem:[%s1041] sm:$0xff]
    %v1043 = vld [vmem:[%s1041 + $0x8] sm:$0xff]
    %v1044 = vld [vmem:[%s1041 + $0x10] sm:$0xff]
    %v1045 = vld [vmem:[%s1041 + $0x18] sm:$0xff]
    %v1046 = vpack.c.bf16 %v1038, %v1038
    %1047 = vmatpush.bf16.msra.mxu0 %v847
    %1048 = vmatpush.bf16.msra.mxu0 %v843
    %1049 = vmatpush.bf16.msra.mxu0 %v839
    %1050 = vmatpush.bf16.msra.mxu0 %v835
    %1051 = vmatpush.bf16.msra.mxu0 %v831
    %1052 = vmatpush.bf16.msra.mxu0 %v827
    %1053 = vmatpush.bf16.msra.mxu0 %v823
    %1054 = vmatpush.bf16.msra.mxu0 %v819
    %1055 = vmatmul.bf16.gmra.mxu0 %v1046
    %v1056 = vpop.f32.mrf.mxu0
    %v1057 = vadd.f32 0.0, %v1056
    %v1058 = vpop.f32.mrf.mxu0
    %1059 = vdwg.mxu0
    %1060 = vmatpush.bf16.msra.mxu0 %v848
    %1061 = vmatpush.bf16.msra.mxu0 %v844
    %1062 = vmatpush.bf16.msra.mxu0 %v840
    %1063 = vmatpush.bf16.msra.mxu0 %v836
    %1064 = vmatpush.bf16.msra.mxu0 %v832
    %1065 = vmatpush.bf16.msra.mxu0 %v828
    %1066 = vmatpush.bf16.msra.mxu0 %v824
    %1067 = vmatpush.bf16.msra.mxu0 %v820
    %1068 = vmatmul.bf16.gmra.mxu0 %v1046
    %v1069 = vpop.f32.mrf.mxu0
    %v1070 = vadd.f32 0.0, %v1069
    %v1071 = vpop.f32.mrf.mxu0
    %1072 = vdwg.mxu0
    %1073 = vmatpush.bf16.msra.mxu0 %v849
    %1074 = vmatpush.bf16.msra.mxu0 %v845
    %1075 = vmatpush.bf16.msra.mxu0 %v841
    %1076 = vmatpush.bf16.msra.mxu0 %v837
    %1077 = vmatpush.bf16.msra.mxu0 %v833
    %1078 = vmatpush.bf16.msra.mxu0 %v829
    %1079 = vmatpush.bf16.msra.mxu0 %v825
    %1080 = vmatpush.bf16.msra.mxu0 %v821
    %1081 = vmatmul.bf16.gmra.mxu0 %v1046
    %v1082 = vpop.f32.mrf.mxu0
    %v1083 = vadd.f32 0.0, %v1082
    %v1084 = vpop.f32.mrf.mxu0
    %1085 = vdwg.mxu0
    %1086 = vmatpush.bf16.msra.mxu0 %v850
    %1087 = vmatpush.bf16.msra.mxu0 %v846
    %1088 = vmatpush.bf16.msra.mxu0 %v842
    %1089 = vmatpush.bf16.msra.mxu0 %v838
    %1090 = vmatpush.bf16.msra.mxu0 %v834
    %1091 = vmatpush.bf16.msra.mxu0 %v830
    %1092 = vmatpush.bf16.msra.mxu0 %v826
    %1093 = vmatpush.bf16.msra.mxu0 %v822
    %1094 = vmatmul.bf16.gmra.mxu0 %v1046
    %v1095 = vpop.f32.mrf.mxu0
    %v1096 = vadd.f32 0.0, %v1095
    %v1097 = vpop.f32.mrf.mxu0
    %1098 = vdwg.mxu0
    %v1099 = vadd.f32 %v1042, %v1057
    %v1100 = vadd.f32 %v1043, %v1070
    %v1101 = vadd.f32 %v1044, %v1083
    %v1102 = vadd.f32 %v1045, %v1096
    %v1103 = vmul.f32 %v1099, 0.5
    %v1104 = vtanh.pop %v1103
    %v1105 = vmul.f32 %v1104, 0.5
    %v1106 = vadd.f32 %v1105, 0.5
    %v1107 = vmul.f32 %v1100, 0.5
    %v1108 = vtanh.pop %v1107
    %v1109 = vmul.f32 %v1108, 0.5
    %v1110 = vadd.f32 %v1109, 0.5
    %v1111 = vtanh.pop %v1101
    %v1112 = vmul.f32 %v1102, 0.5
    %v1113 = vtanh.pop %v1112
    %v1114 = vmul.f32 %v1113, 0.5
    %v1115 = vadd.f32 %v1114, 0.5
    %v1116 = vmul.f32 %v1110, %v1036
    %v1117 = vmul.f32 %v1106, %v1111
    %v1118 = vadd.f32 %v1116, %v1117
    %v1119 = vtanh.pop %v1118
    %v1120 = vmul.f32 %v1115, %v1119
    %s1121 = smul.u32 3, 4
    %s1122 = smul.addr %s1121, 8
    %s1123 = scalar_lea.vmem [#allocation2], %s1122
    %v1124 = vld [vmem:[%s1123] sm:$0xff]
    %v1125 = vld [vmem:[%s1123 + $0x8] sm:$0xff]
    %v1126 = vld [vmem:[%s1123 + $0x10] sm:$0xff]
    %v1127 = vld [vmem:[%s1123 + $0x18] sm:$0xff]
    %v1128 = vpack.c.bf16 %v1120, %v1120
    %1129 = vmatpush.bf16.msra.mxu0 %v847
    %1130 = vmatpush.bf16.msra.mxu0 %v843
    %1131 = vmatpush.bf16.msra.mxu0 %v839
    %1132 = vmatpush.bf16.msra.mxu0 %v835
    %1133 = vmatpush.bf16.msra.mxu0 %v831
    %1134 = vmatpush.bf16.msra.mxu0 %v827
    %1135 = vmatpush.bf16.msra.mxu0 %v823
    %1136 = vmatpush.bf16.msra.mxu0 %v819
    %1137 = vmatmul.bf16.gmra.mxu0 %v1128
    %v1138 = vpop.f32.mrf.mxu0
    %v1139 = vadd.f32 0.0, %v1138
    %v1140 = vpop.f32.mrf.mxu0
    %1141 = vdwg.mxu0
    %1142 = vmatpush.bf16.msra.mxu0 %v848
    %1143 = vmatpush.bf16.msra.mxu0 %v844
    %1144 = vmatpush.bf16.msra.mxu0 %v840
    %1145 = vmatpush.bf16.msra.mxu0 %v836
    %1146 = vmatpush.bf16.msra.mxu0 %v832
    %1147 = vmatpush.bf16.msra.mxu0 %v828
    %1148 = vmatpush.bf16.msra.mxu0 %v824
    %1149 = vmatpush.bf16.msra.mxu0 %v820
    %1150 = vmatmul.bf16.gmra.mxu0 %v1128
    %v1151 = vpop.f32.mrf.mxu0
    %v1152 = vadd.f32 0.0, %v1151
    %v1153 = vpop.f32.mrf.mxu0
    %1154 = vdwg.mxu0
    %1155 = vmatpush.bf16.msra.mxu0 %v849
    %1156 = vmatpush.bf16.msra.mxu0 %v845
    %1157 = vmatpush.bf16.msra.mxu0 %v841
    %1158 = vmatpush.bf16.msra.mxu0 %v837
    %1159 = vmatpush.bf16.msra.mxu0 %v833
    %1160 = vmatpush.bf16.msra.mxu0 %v829
    %1161 = vmatpush.bf16.msra.mxu0 %v825
    %1162 = vmatpush.bf16.msra.mxu0 %v821
    %1163 = vmatmul.bf16.gmra.mxu0 %v1128
    %v1164 = vpop.f32.mrf.mxu0
    %v1165 = vadd.f32 0.0, %v1164
    %v1166 = vpop.f32.mrf.mxu0
    %1167 = vdwg.mxu0
    %1168 = vmatpush.bf16.msra.mxu0 %v850
    %1169 = vmatpush.bf16.msra.mxu0 %v846
    %1170 = vmatpush.bf16.msra.mxu0 %v842
    %1171 = vmatpush.bf16.msra.mxu0 %v838
    %1172 = vmatpush.bf16.msra.mxu0 %v834
    %1173 = vmatpush.bf16.msra.mxu0 %v830
    %1174 = vmatpush.bf16.msra.mxu0 %v826
    %1175 = vmatpush.bf16.msra.mxu0 %v822
    %1176 = vmatmul.bf16.gmra.mxu0 %v1128
    %v1177 = vpop.f32.mrf.mxu0
    %v1178 = vadd.f32 0.0, %v1177
    %v1179 = vpop.f32.mrf.mxu0
    %1180 = vdwg.mxu0
    %v1181 = vadd.f32 %v1124, %v1139
    %v1182 = vadd.f32 %v1125, %v1152
    %v1183 = vadd.f32 %v1126, %v1165
    %v1184 = vadd.f32 %v1127, %v1178
    %v1185 = vmul.f32 %v1181, 0.5
    %v1186 = vtanh.pop %v1185
    %v1187 = vmul.f32 %v1186, 0.5
    %v1188 = vadd.f32 %v1187, 0.5
    %v1189 = vmul.f32 %v1182, 0.5
    %v1190 = vtanh.pop %v1189
    %v1191 = vmul.f32 %v1190, 0.5
    %v1192 = vadd.f32 %v1191, 0.5
    %v1193 = vtanh.pop %v1183
    %v1194 = vmul.f32 %v1184, 0.5
    %v1195 = vtanh.pop %v1194
    %v1196 = vmul.f32 %v1195, 0.5
    %v1197 = vadd.f32 %v1196, 0.5
    %v1198 = vmul.f32 %v1192, %v1118
    %v1199 = vmul.f32 %v1188, %v1193
    %v1200 = vadd.f32 %v1198, %v1199
    %v1201 = vtanh.pop %v1200
    %v1202 = vmul.f32 %v1197, %v1201
    %s1203 = smul.u32 4, 4
    %s1204 = smul.addr %s1203, 8
    %s1205 = scalar_lea.vmem [#allocation2], %s1204
    %v1206 = vld [vmem:[%s1205] sm:$0xff]
    %v1207 = vld [vmem:[%s1205 + $0x8] sm:$0xff]
    %v1208 = vld [vmem:[%s1205 + $0x10] sm:$0xff]
    %v1209 = vld [vmem:[%s1205 + $0x18] sm:$0xff]
    %v1210 = vpack.c.bf16 %v1202, %v1202
    %1211 = vmatpush.bf16.msra.mxu0 %v847
    %1212 = vmatpush.bf16.msra.mxu0 %v843
    %1213 = vmatpush.bf16.msra.mxu0 %v839
    %1214 = vmatpush.bf16.msra.mxu0 %v835
    %1215 = vmatpush.bf16.msra.mxu0 %v831
    %1216 = vmatpush.bf16.msra.mxu0 %v827
    %1217 = vmatpush.bf16.msra.mxu0 %v823
    %1218 = vmatpush.bf16.msra.mxu0 %v819
    %1219 = vmatmul.bf16.gmra.mxu0 %v1210
    %v1220 = vpop.f32.mrf.mxu0
    %v1221 = vadd.f32 0.0, %v1220
    %v1222 = vpop.f32.mrf.mxu0
    %1223 = vdwg.mxu0
    %1224 = vmatpush.bf16.msra.mxu0 %v848
    %1225 = vmatpush.bf16.msra.mxu0 %v844
    %1226 = vmatpush.bf16.msra.mxu0 %v840
    %1227 = vmatpush.bf16.msra.mxu0 %v836
    %1228 = vmatpush.bf16.msra.mxu0 %v832
    %1229 = vmatpush.bf16.msra.mxu0 %v828
    %1230 = vmatpush.bf16.msra.mxu0 %v824
    %1231 = vmatpush.bf16.msra.mxu0 %v820
    %1232 = vmatmul.bf16.gmra.mxu0 %v1210
    %v1233 = vpop.f32.mrf.mxu0
    %v1234 = vadd.f32 0.0, %v1233
    %v1235 = vpop.f32.mrf.mxu0
    %1236 = vdwg.mxu0
    %1237 = vmatpush.bf16.msra.mxu0 %v849
    %1238 = vmatpush.bf16.msra.mxu0 %v845
    %1239 = vmatpush.bf16.msra.mxu0 %v841
    %1240 = vmatpush.bf16.msra.mxu0 %v837
    %1241 = vmatpush.bf16.msra.mxu0 %v833
    %1242 = vmatpush.bf16.msra.mxu0 %v829
    %1243 = vmatpush.bf16.msra.mxu0 %v825
    %1244 = vmatpush.bf16.msra.mxu0 %v821
    %1245 = vmatmul.bf16.gmra.mxu0 %v1210
    %v1246 = vpop.f32.mrf.mxu0
    %v1247 = vadd.f32 0.0, %v1246
    %v1248 = vpop.f32.mrf.mxu0
    %1249 = vdwg.mxu0
    %1250 = vmatpush.bf16.msra.mxu0 %v850
    %1251 = vmatpush.bf16.msra.mxu0 %v846
    %1252 = vmatpush.bf16.msra.mxu0 %v842
    %1253 = vmatpush.bf16.msra.mxu0 %v838
    %1254 = vmatpush.bf16.msra.mxu0 %v834
    %1255 = vmatpush.bf16.msra.mxu0 %v830
    %1256 = vmatpush.bf16.msra.mxu0 %v826
    %1257 = vmatpush.bf16.msra.mxu0 %v822
    %1258 = vmatmul.bf16.gmra.mxu0 %v1210
    %v1259 = vpop.f32.mrf.mxu0
    %v1260 = vadd.f32 0.0, %v1259
    %v1261 = vpop.f32.mrf.mxu0
    %1262 = vdwg.mxu0
    %v1263 = vadd.f32 %v1206, %v1221
    %v1264 = vadd.f32 %v1207, %v1234
    %v1265 = vadd.f32 %v1208, %v1247
    %v1266 = vadd.f32 %v1209, %v1260
    %v1267 = vmul.f32 %v1263, 0.5
    %v1268 = vtanh.pop %v1267
    %v1269 = vmul.f32 %v1268, 0.5
    %v1270 = vadd.f32 %v1269, 0.5
    %v1271 = vmul.f32 %v1264, 0.5
    %v1272 = vtanh.pop %v1271
    %v1273 = vmul.f32 %v1272, 0.5
    %v1274 = vadd.f32 %v1273, 0.5
    %v1275 = vtanh.pop %v1265
    %v1276 = vmul.f32 %v1266, 0.5
    %v1277 = vtanh.pop %v1276
    %v1278 = vmul.f32 %v1277, 0.5
    %v1279 = vadd.f32 %v1278, 0.5
    %v1280 = vmul.f32 %v1274, %v1200
    %v1281 = vmul.f32 %v1270, %v1275
    %v1282 = vadd.f32 %v1280, %v1281
    %v1283 = vtanh.pop %v1282
    %v1284 = vmul.f32 %v1279, %v1283
    %s1285 = smul.u32 5, 4
    %s1286 = smul.addr %s1285, 8
    %s1287 = scalar_lea.vmem [#allocation2], %s1286
    %v1288 = vld [vmem:[%s1287] sm:$0xff]
    %v1289 = vld [vmem:[%s1287 + $0x8] sm:$0xff]
    %v1290 = vld [vmem:[%s1287 + $0x10] sm:$0xff]
    %v1291 = vld [vmem:[%s1287 + $0x18] sm:$0xff]
    %v1292 = vpack.c.bf16 %v1284, %v1284
    %1293 = vmatpush.bf16.msra.mxu0 %v847
    %1294 = vmatpush.bf16.msra.mxu0 %v843
    %1295 = vmatpush.bf16.msra.mxu0 %v839
    %1296 = vmatpush.bf16.msra.mxu0 %v835
    %1297 = vmatpush.bf16.msra.mxu0 %v831
    %1298 = vmatpush.bf16.msra.mxu0 %v827
    %1299 = vmatpush.bf16.msra.mxu0 %v823
    %1300 = vmatpush.bf16.msra.mxu0 %v819
    %1301 = vmatmul.bf16.gmra.mxu0 %v1292
    %v1302 = vpop.f32.mrf.mxu0
    %v1303 = vadd.f32 0.0, %v1302
    %v1304 = vpop.f32.mrf.mxu0
    %1305 = vdwg.mxu0
    %1306 = vmatpush.bf16.msra.mxu0 %v848
    %1307 = vmatpush.bf16.msra.mxu0 %v844
    %1308 = vmatpush.bf16.msra.mxu0 %v840
    %1309 = vmatpush.bf16.msra.mxu0 %v836
    %1310 = vmatpush.bf16.msra.mxu0 %v832
    %1311 = vmatpush.bf16.msra.mxu0 %v828
    %1312 = vmatpush.bf16.msra.mxu0 %v824
    %1313 = vmatpush.bf16.msra.mxu0 %v820
    %1314 = vmatmul.bf16.gmra.mxu0 %v1292
    %v1315 = vpop.f32.mrf.mxu0
    %v1316 = vadd.f32 0.0, %v1315
    %v1317 = vpop.f32.mrf.mxu0
    %1318 = vdwg.mxu0
    %1319 = vmatpush.bf16.msra.mxu0 %v849
    %1320 = vmatpush.bf16.msra.mxu0 %v845
    %1321 = vmatpush.bf16.msra.mxu0 %v841
    %1322 = vmatpush.bf16.msra.mxu0 %v837
    %1323 = vmatpush.bf16.msra.mxu0 %v833
    %1324 = vmatpush.bf16.msra.mxu0 %v829
    %1325 = vmatpush.bf16.msra.mxu0 %v825
    %1326 = vmatpush.bf16.msra.mxu0 %v821
    %1327 = vmatmul.bf16.gmra.mxu0 %v1292
    %v1328 = vpop.f32.mrf.mxu0
    %v1329 = vadd.f32 0.0, %v1328
    %v1330 = vpop.f32.mrf.mxu0
    %1331 = vdwg.mxu0
    %1332 = vmatpush.bf16.msra.mxu0 %v850
    %1333 = vmatpush.bf16.msra.mxu0 %v846
    %1334 = vmatpush.bf16.msra.mxu0 %v842
    %1335 = vmatpush.bf16.msra.mxu0 %v838
    %1336 = vmatpush.bf16.msra.mxu0 %v834
    %1337 = vmatpush.bf16.msra.mxu0 %v830
    %1338 = vmatpush.bf16.msra.mxu0 %v826
    %1339 = vmatpush.bf16.msra.mxu0 %v822
    %1340 = vmatmul.bf16.gmra.mxu0 %v1292
    %v1341 = vpop.f32.mrf.mxu0
    %v1342 = vadd.f32 0.0, %v1341
    %v1343 = vpop.f32.mrf.mxu0
    %1344 = vdwg.mxu0
    %v1345 = vadd.f32 %v1288, %v1303
    %v1346 = vadd.f32 %v1289, %v1316
    %v1347 = vadd.f32 %v1290, %v1329
    %v1348 = vadd.f32 %v1291, %v1342
    %v1349 = vmul.f32 %v1345, 0.5
    %v1350 = vtanh.pop %v1349
    %v1351 = vmul.f32 %v1350, 0.5
    %v1352 = vadd.f32 %v1351, 0.5
    %v1353 = vmul.f32 %v1346, 0.5
    %v1354 = vtanh.pop %v1353
    %v1355 = vmul.f32 %v1354, 0.5
    %v1356 = vadd.f32 %v1355, 0.5
    %v1357 = vtanh.pop %v1347
    %v1358 = vmul.f32 %v1348, 0.5
    %v1359 = vtanh.pop %v1358
    %v1360 = vmul.f32 %v1359, 0.5
    %v1361 = vadd.f32 %v1360, 0.5
    %v1362 = vmul.f32 %v1356, %v1282
    %v1363 = vmul.f32 %v1352, %v1357
    %v1364 = vadd.f32 %v1362, %v1363
    %v1365 = vtanh.pop %v1364
    %v1366 = vmul.f32 %v1361, %v1365
    %s1367 = smul.u32 6, 4
    %s1368 = smul.addr %s1367, 8
    %s1369 = scalar_lea.vmem [#allocation2], %s1368
    %v1370 = vld [vmem:[%s1369] sm:$0xff]
    %v1371 = vld [vmem:[%s1369 + $0x8] sm:$0xff]
    %v1372 = vld [vmem:[%s1369 + $0x10] sm:$0xff]
    %v1373 = vld [vmem:[%s1369 + $0x18] sm:$0xff]
    %v1374 = vpack.c.bf16 %v1366, %v1366
    %1375 = vmatpush.bf16.msra.mxu0 %v847
    %1376 = vmatpush.bf16.msra.mxu0 %v843
    %1377 = vmatpush.bf16.msra.mxu0 %v839
    %1378 = vmatpush.bf16.msra.mxu0 %v835
    %1379 = vmatpush.bf16.msra.mxu0 %v831
    %1380 = vmatpush.bf16.msra.mxu0 %v827
    %1381 = vmatpush.bf16.msra.mxu0 %v823
    %1382 = vmatpush.bf16.msra.mxu0 %v819
    %1383 = vmatmul.bf16.gmra.mxu0 %v1374
    %v1384 = vpop.f32.mrf.mxu0
    %v1385 = vadd.f32 0.0, %v1384
    %v1386 = vpop.f32.mrf.mxu0
    %1387 = vdwg.mxu0
    %1388 = vmatpush.bf16.msra.mxu0 %v848
    %1389 = vmatpush.bf16.msra.mxu0 %v844
    %1390 = vmatpush.bf16.msra.mxu0 %v840
    %1391 = vmatpush.bf16.msra.mxu0 %v836
    %1392 = vmatpush.bf16.msra.mxu0 %v832
    %1393 = vmatpush.bf16.msra.mxu0 %v828
    %1394 = vmatpush.bf16.msra.mxu0 %v824
    %1395 = vmatpush.bf16.msra.mxu0 %v820
    %1396 = vmatmul.bf16.gmra.mxu0 %v1374
    %v1397 = vpop.f32.mrf.mxu0
    %v1398 = vadd.f32 0.0, %v1397
    %v1399 = vpop.f32.mrf.mxu0
    %1400 = vdwg.mxu0
    %1401 = vmatpush.bf16.msra.mxu0 %v849
    %1402 = vmatpush.bf16.msra.mxu0 %v845
    %1403 = vmatpush.bf16.msra.mxu0 %v841
    %1404 = vmatpush.bf16.msra.mxu0 %v837
    %1405 = vmatpush.bf16.msra.mxu0 %v833
    %1406 = vmatpush.bf16.msra.mxu0 %v829
    %1407 = vmatpush.bf16.msra.mxu0 %v825
    %1408 = vmatpush.bf16.msra.mxu0 %v821
    %1409 = vmatmul.bf16.gmra.mxu0 %v1374
    %v1410 = vpop.f32.mrf.mxu0
    %v1411 = vadd.f32 0.0, %v1410
    %v1412 = vpop.f32.mrf.mxu0
    %1413 = vdwg.mxu0
    %1414 = vmatpush.bf16.msra.mxu0 %v850
    %1415 = vmatpush.bf16.msra.mxu0 %v846
    %1416 = vmatpush.bf16.msra.mxu0 %v842
    %1417 = vmatpush.bf16.msra.mxu0 %v838
    %1418 = vmatpush.bf16.msra.mxu0 %v834
    %1419 = vmatpush.bf16.msra.mxu0 %v830
    %1420 = vmatpush.bf16.msra.mxu0 %v826
    %1421 = vmatpush.bf16.msra.mxu0 %v822
    %1422 = vmatmul.bf16.gmra.mxu0 %v1374
    %v1423 = vpop.f32.mrf.mxu0
    %v1424 = vadd.f32 0.0, %v1423
    %v1425 = vpop.f32.mrf.mxu0
    %1426 = vdwg.mxu0
    %v1427 = vadd.f32 %v1370, %v1385
    %v1428 = vadd.f32 %v1371, %v1398
    %v1429 = vadd.f32 %v1372, %v1411
    %v1430 = vadd.f32 %v1373, %v1424
    %v1431 = vmul.f32 %v1427, 0.5
    %v1432 = vtanh.pop %v1431
    %v1433 = vmul.f32 %v1432, 0.5
    %v1434 = vadd.f32 %v1433, 0.5
    %v1435 = vmul.f32 %v1428, 0.5
    %v1436 = vtanh.pop %v1435
    %v1437 = vmul.f32 %v1436, 0.5
    %v1438 = vadd.f32 %v1437, 0.5
    %v1439 = vtanh.pop %v1429
    %v1440 = vmul.f32 %v1430, 0.5
    %v1441 = vtanh.pop %v1440
    %v1442 = vmul.f32 %v1441, 0.5
    %v1443 = vadd.f32 %v1442, 0.5
    %v1444 = vmul.f32 %v1438, %v1364
    %v1445 = vmul.f32 %v1434, %v1439
    %v1446 = vadd.f32 %v1444, %v1445
    %v1447 = vtanh.pop %v1446
    %v1448 = vmul.f32 %v1443, %v1447
    %s1449 = smul.u32 7, 4
    %s1450 = smul.addr %s1449, 8
    %s1451 = scalar_lea.vmem [#allocation2], %s1450
    %v1452 = vld [vmem:[%s1451] sm:$0xff]
    %v1453 = vld [vmem:[%s1451 + $0x8] sm:$0xff]
    %v1454 = vld [vmem:[%s1451 + $0x10] sm:$0xff]
    %v1455 = vld [vmem:[%s1451 + $0x18] sm:$0xff]
    %v1456 = vpack.c.bf16 %v1448, %v1448
    %1457 = vmatpush.bf16.msra.mxu0 %v847
    %1458 = vmatpush.bf16.msra.mxu0 %v843
    %1459 = vmatpush.bf16.msra.mxu0 %v839
    %1460 = vmatpush.bf16.msra.mxu0 %v835
    %1461 = vmatpush.bf16.msra.mxu0 %v831
    %1462 = vmatpush.bf16.msra.mxu0 %v827
    %1463 = vmatpush.bf16.msra.mxu0 %v823
    %1464 = vmatpush.bf16.msra.mxu0 %v819
    %1465 = vmatmul.bf16.gmra.mxu0 %v1456
    %v1466 = vpop.f32.mrf.mxu0
    %v1467 = vadd.f32 0.0, %v1466
    %v1468 = vpop.f32.mrf.mxu0
    %1469 = vdwg.mxu0
    %1470 = vmatpush.bf16.msra.mxu0 %v848
    %1471 = vmatpush.bf16.msra.mxu0 %v844
    %1472 = vmatpush.bf16.msra.mxu0 %v840
    %1473 = vmatpush.bf16.msra.mxu0 %v836
    %1474 = vmatpush.bf16.msra.mxu0 %v832
    %1475 = vmatpush.bf16.msra.mxu0 %v828
    %1476 = vmatpush.bf16.msra.mxu0 %v824
    %1477 = vmatpush.bf16.msra.mxu0 %v820
    %1478 = vmatmul.bf16.gmra.mxu0 %v1456
    %v1479 = vpop.f32.mrf.mxu0
    %v1480 = vadd.f32 0.0, %v1479
    %v1481 = vpop.f32.mrf.mxu0
    %1482 = vdwg.mxu0
    %1483 = vmatpush.bf16.msra.mxu0 %v849
    %1484 = vmatpush.bf16.msra.mxu0 %v845
    %1485 = vmatpush.bf16.msra.mxu0 %v841
    %1486 = vmatpush.bf16.msra.mxu0 %v837
    %1487 = vmatpush.bf16.msra.mxu0 %v833
    %1488 = vmatpush.bf16.msra.mxu0 %v829
    %1489 = vmatpush.bf16.msra.mxu0 %v825
    %1490 = vmatpush.bf16.msra.mxu0 %v821
    %1491 = vmatmul.bf16.gmra.mxu0 %v1456
    %v1492 = vpop.f32.mrf.mxu0
    %v1493 = vadd.f32 0.0, %v1492
    %v1494 = vpop.f32.mrf.mxu0
    %1495 = vdwg.mxu0
    %1496 = vmatpush.bf16.msra.mxu0 %v850
    %1497 = vmatpush.bf16.msra.mxu0 %v846
    %1498 = vmatpush.bf16.msra.mxu0 %v842
    %1499 = vmatpush.bf16.msra.mxu0 %v838
    %1500 = vmatpush.bf16.msra.mxu0 %v834
    %1501 = vmatpush.bf16.msra.mxu0 %v830
    %1502 = vmatpush.bf16.msra.mxu0 %v826
    %1503 = vmatpush.bf16.msra.mxu0 %v822
    %1504 = vmatmul.bf16.gmra.mxu0 %v1456
    %v1505 = vpop.f32.mrf.mxu0
    %v1506 = vadd.f32 0.0, %v1505
    %v1507 = vpop.f32.mrf.mxu0
    %1508 = vdwg.mxu0
    %v1509 = vadd.f32 %v1452, %v1467
    %v1510 = vadd.f32 %v1453, %v1480
    %v1511 = vadd.f32 %v1454, %v1493
    %v1512 = vadd.f32 %v1455, %v1506
    %v1513 = vmul.f32 %v1509, 0.5
    %v1514 = vtanh.pop %v1513
    %v1515 = vmul.f32 %v1514, 0.5
    %v1516 = vadd.f32 %v1515, 0.5
    %v1517 = vmul.f32 %v1510, 0.5
    %v1518 = vtanh.pop %v1517
    %v1519 = vmul.f32 %v1518, 0.5
    %v1520 = vadd.f32 %v1519, 0.5
    %v1521 = vtanh.pop %v1511
    %v1522 = vmul.f32 %v1512, 0.5
    %v1523 = vtanh.pop %v1522
    %v1524 = vmul.f32 %v1523, 0.5
    %v1525 = vadd.f32 %v1524, 0.5
    %v1526 = vmul.f32 %v1520, %v1446
    %v1527 = vmul.f32 %v1516, %v1521
    %v1528 = vadd.f32 %v1526, %v1527
    %v1529 = vtanh.pop %v1528
    %v1530 = vmul.f32 %v1525, %v1529
    %v1531 = vld [vmem:[#allocation6] sm:$0xff]
    %v1532 = vpack.c.bf16 %v1531, %v1531
    %v1533 = vpack.c.bf16 %v1530, %v1530
    %v1534 = vld [vmem:[#allocation12] sm:$0xff]
    %v1535 = vld [vmem:[#allocation12 + $0x8] sm:$0xff]
    %v1536 = vld [vmem:[#allocation12 + $0x10] sm:$0xff]
    %v1537 = vld [vmem:[#allocation12 + $0x18] sm:$0xff]
    %v1538 = vld [vmem:[#allocation12 + $0x20] sm:$0xff]
    %v1539 = vld [vmem:[#allocation12 + $0x28] sm:$0xff]
    %v1540 = vld [vmem:[#allocation12 + $0x30] sm:$0xff]
    %v1541 = vld [vmem:[#allocation12 + $0x38] sm:$0xff]
    %v1542 = vld [vmem:[#allocation12 + $0x40] sm:$0xff]
    %v1543 = vld [vmem:[#allocation12 + $0x48] sm:$0xff]
    %v1544 = vld [vmem:[#allocation12 + $0x50] sm:$0xff]
    %v1545 = vld [vmem:[#allocation12 + $0x58] sm:$0xff]
    %v1546 = vld [vmem:[#allocation12 + $0x60] sm:$0xff]
    %v1547 = vld [vmem:[#allocation12 + $0x68] sm:$0xff]
    %v1548 = vld [vmem:[#allocation12 + $0x70] sm:$0xff]
    %v1549 = vld [vmem:[#allocation12 + $0x78] sm:$0xff]
    %v1550 = vld [vmem:[#allocation12 + $0x80] sm:$0xff]
    %v1551 = vld [vmem:[#allocation12 + $0x88] sm:$0xff]
    %v1552 = vld [vmem:[#allocation12 + $0x90] sm:$0xff]
    %v1553 = vld [vmem:[#allocation12 + $0x98] sm:$0xff]
    %v1554 = vld [vmem:[#allocation12 + $0xa0] sm:$0xff]
    %v1555 = vld [vmem:[#allocation12 + $0xa8] sm:$0xff]
    %v1556 = vld [vmem:[#allocation12 + $0xb0] sm:$0xff]
    %v1557 = vld [vmem:[#allocation12 + $0xb8] sm:$0xff]
    %v1558 = vld [vmem:[#allocation12 + $0xc0] sm:$0xff]
    %v1559 = vld [vmem:[#allocation12 + $0xc8] sm:$0xff]
    %v1560 = vld [vmem:[#allocation12 + $0xd0] sm:$0xff]
    %v1561 = vld [vmem:[#allocation12 + $0xd8] sm:$0xff]
    %v1562 = vld [vmem:[#allocation12 + $0xe0] sm:$0xff]
    %v1563 = vld [vmem:[#allocation12 + $0xe8] sm:$0xff]
    %v1564 = vld [vmem:[#allocation12 + $0xf0] sm:$0xff]
    %v1565 = vld [vmem:[#allocation12 + $0xf8] sm:$0xff]
    %v1566 = vld [vmem:[#allocation12 + $0x100] sm:$0xff]
    %v1567 = vld [vmem:[#allocation12 + $0x108] sm:$0xff]
    %v1568 = vld [vmem:[#allocation12 + $0x110] sm:$0xff]
    %v1569 = vld [vmem:[#allocation12 + $0x118] sm:$0xff]
    %v1570 = vld [vmem:[#allocation12 + $0x120] sm:$0xff]
    %v1571 = vld [vmem:[#allocation12 + $0x128] sm:$0xff]
    %v1572 = vld [vmem:[#allocation12 + $0x130] sm:$0xff]
    %v1573 = vld [vmem:[#allocation12 + $0x138] sm:$0xff]
    %v1574 = vld [vmem:[#allocation12 + $0x140] sm:$0xff]
    %v1575 = vld [vmem:[#allocation12 + $0x148] sm:$0xff]
    %v1576 = vld [vmem:[#allocation12 + $0x150] sm:$0xff]
    %v1577 = vld [vmem:[#allocation12 + $0x158] sm:$0xff]
    %v1578 = vld [vmem:[#allocation12 + $0x160] sm:$0xff]
    %v1579 = vld [vmem:[#allocation12 + $0x168] sm:$0xff]
    %v1580 = vld [vmem:[#allocation12 + $0x170] sm:$0xff]
    %v1581 = vld [vmem:[#allocation12 + $0x178] sm:$0xff]
    %v1582 = vld [vmem:[#allocation12 + $0x180] sm:$0xff]
    %v1583 = vld [vmem:[#allocation12 + $0x188] sm:$0xff]
    %v1584 = vld [vmem:[#allocation12 + $0x190] sm:$0xff]
    %v1585 = vld [vmem:[#allocation12 + $0x198] sm:$0xff]
    %v1586 = vld [vmem:[#allocation12 + $0x1a0] sm:$0xff]
    %v1587 = vld [vmem:[#allocation12 + $0x1a8] sm:$0xff]
    %v1588 = vld [vmem:[#allocation12 + $0x1b0] sm:$0xff]
    %v1589 = vld [vmem:[#allocation12 + $0x1b8] sm:$0xff]
    %v1590 = vld [vmem:[#allocation12 + $0x1c0] sm:$0xff]
    %v1591 = vld [vmem:[#allocation12 + $0x1c8] sm:$0xff]
    %v1592 = vld [vmem:[#allocation12 + $0x1d0] sm:$0xff]
    %v1593 = vld [vmem:[#allocation12 + $0x1d8] sm:$0xff]
    %v1594 = vld [vmem:[#allocation12 + $0x1e0] sm:$0xff]
    %v1595 = vld [vmem:[#allocation12 + $0x1e8] sm:$0xff]
    %v1596 = vld [vmem:[#allocation12 + $0x1f0] sm:$0xff]
    %v1597 = vld [vmem:[#allocation12 + $0x1f8] sm:$0xff]
    %v1598 = vld [vmem:[%s6] sm:$0xf]
    %v1600 = vperm.slane %v1598, 0
    %v1601 = vperm.slane %v1598, 1
    %v1602 = vperm.slane %v1598, 2
    %v1603 = vperm.slane %v1598, 3
    %v1672 = vunpack.c.l.b16 %v1534
    %v1673 = vunpack.c.h.b16 %v1534
    %v1674 = vunpack.c.l.b16 %v1535
    %v1675 = vunpack.c.h.b16 %v1535
    %v1676 = vunpack.c.l.b16 %v1536
    %v1677 = vunpack.c.h.b16 %v1536
    %v1678 = vunpack.c.l.b16 %v1537
    %v1679 = vunpack.c.h.b16 %v1537
    %v1680 = vunpack.c.l.b16 %v1538
    %v1681 = vunpack.c.h.b16 %v1538
    %v1682 = vunpack.c.l.b16 %v1539
    %v1683 = vunpack.c.h.b16 %v1539
    %v1684 = vunpack.c.l.b16 %v1540
    %v1685 = vunpack.c.h.b16 %v1540
    %v1686 = vunpack.c.l.b16 %v1541
    %v1687 = vunpack.c.h.b16 %v1541
    %v1688 = vunpack.c.l.b16 %v1542
    %v1689 = vunpack.c.h.b16 %v1542
    %v1690 = vunpack.c.l.b16 %v1543
    %v1691 = vunpack.c.h.b16 %v1543
    %v1692 = vunpack.c.l.b16 %v1544
    %v1693 = vunpack.c.h.b16 %v1544
    %v1694 = vunpack.c.l.b16 %v1545
    %v1695 = vunpack.c.h.b16 %v1545
    %v1696 = vunpack.c.l.b16 %v1546
    %v1697 = vunpack.c.h.b16 %v1546
    %v1698 = vunpack.c.l.b16 %v1547
    %v1699 = vunpack.c.h.b16 %v1547
    %v1700 = vunpack.c.l.b16 %v1548
    %v1701 = vunpack.c.h.b16 %v1548
    %v1702 = vunpack.c.l.b16 %v1549
    %v1703 = vunpack.c.h.b16 %v1549
    %v1704 = vunpack.c.l.b16 %v1550
    %v1705 = vunpack.c.h.b16 %v1550
    %v1706 = vunpack.c.l.b16 %v1551
    %v1707 = vunpack.c.h.b16 %v1551
    %v1708 = vunpack.c.l.b16 %v1552
    %v1709 = vunpack.c.h.b16 %v1552
    %v1710 = vunpack.c.l.b16 %v1553
    %v1711 = vunpack.c.h.b16 %v1553
    %v1712 = vunpack.c.l.b16 %v1554
    %v1713 = vunpack.c.h.b16 %v1554
    %v1714 = vunpack.c.l.b16 %v1555
    %v1715 = vunpack.c.h.b16 %v1555
    %v1716 = vunpack.c.l.b16 %v1556
    %v1717 = vunpack.c.h.b16 %v1556
    %v1718 = vunpack.c.l.b16 %v1557
    %v1719 = vunpack.c.h.b16 %v1557
    %v1720 = vunpack.c.l.b16 %v1558
    %v1721 = vunpack.c.h.b16 %v1558
    %v1722 = vunpack.c.l.b16 %v1559
    %v1723 = vunpack.c.h.b16 %v1559
    %v1724 = vunpack.c.l.b16 %v1560
    %v1725 = vunpack.c.h.b16 %v1560
    %v1726 = vunpack.c.l.b16 %v1561
    %v1727 = vunpack.c.h.b16 %v1561
    %v1728 = vunpack.c.l.b16 %v1562
    %v1729 = vunpack.c.h.b16 %v1562
    %v1730 = vunpack.c.l.b16 %v1563
    %v1731 = vunpack.c.h.b16 %v1563
    %v1732 = vunpack.c.l.b16 %v1564
    %v1733 = vunpack.c.h.b16 %v1564
    %v1734 = vunpack.c.l.b16 %v1565
    %v1735 = vunpack.c.h.b16 %v1565
    %v1736 = vunpack.c.l.b16 %v1566
    %v1737 = vunpack.c.h.b16 %v1566
    %v1738 = vunpack.c.l.b16 %v1567
    %v1739 = vunpack.c.h.b16 %v1567
    %v1740 = vunpack.c.l.b16 %v1568
    %v1741 = vunpack.c.h.b16 %v1568
    %v1742 = vunpack.c.l.b16 %v1569
    %v1743 = vunpack.c.h.b16 %v1569
    %v1744 = vunpack.c.l.b16 %v1570
    %v1745 = vunpack.c.h.b16 %v1570
    %v1746 = vunpack.c.l.b16 %v1571
    %v1747 = vunpack.c.h.b16 %v1571
    %v1748 = vunpack.c.l.b16 %v1572
    %v1749 = vunpack.c.h.b16 %v1572
    %v1750 = vunpack.c.l.b16 %v1573
    %v1751 = vunpack.c.h.b16 %v1573
    %v1752 = vunpack.c.l.b16 %v1574
    %v1753 = vunpack.c.h.b16 %v1574
    %v1754 = vunpack.c.l.b16 %v1575
    %v1755 = vunpack.c.h.b16 %v1575
    %v1756 = vunpack.c.l.b16 %v1576
    %v1757 = vunpack.c.h.b16 %v1576
    %v1758 = vunpack.c.l.b16 %v1577
    %v1759 = vunpack.c.h.b16 %v1577
    %v1760 = vunpack.c.l.b16 %v1578
    %v1761 = vunpack.c.h.b16 %v1578
    %v1762 = vunpack.c.l.b16 %v1579
    %v1763 = vunpack.c.h.b16 %v1579
    %v1764 = vunpack.c.l.b16 %v1580
    %v1765 = vunpack.c.h.b16 %v1580
    %v1766 = vunpack.c.l.b16 %v1581
    %v1767 = vunpack.c.h.b16 %v1581
    %v1768 = vunpack.c.l.b16 %v1582
    %v1769 = vunpack.c.h.b16 %v1582
    %v1770 = vunpack.c.l.b16 %v1583
    %v1771 = vunpack.c.h.b16 %v1583
    %v1772 = vunpack.c.l.b16 %v1584
    %v1773 = vunpack.c.h.b16 %v1584
    %v1774 = vunpack.c.l.b16 %v1585
    %v1775 = vunpack.c.h.b16 %v1585
    %v1776 = vunpack.c.l.b16 %v1586
    %v1777 = vunpack.c.h.b16 %v1586
    %v1778 = vunpack.c.l.b16 %v1587
    %v1779 = vunpack.c.h.b16 %v1587
    %v1780 = vunpack.c.l.b16 %v1588
    %v1781 = vunpack.c.h.b16 %v1588
    %v1782 = vunpack.c.l.b16 %v1589
    %v1783 = vunpack.c.h.b16 %v1589
    %v1784 = vunpack.c.l.b16 %v1590
    %v1785 = vunpack.c.h.b16 %v1590
    %v1786 = vunpack.c.l.b16 %v1591
    %v1787 = vunpack.c.h.b16 %v1591
    %v1788 = vunpack.c.l.b16 %v1592
    %v1789 = vunpack.c.h.b16 %v1592
    %v1790 = vunpack.c.l.b16 %v1593
    %v1791 = vunpack.c.h.b16 %v1593
    %v1792 = vunpack.c.l.b16 %v1594
    %v1793 = vunpack.c.h.b16 %v1594
    %v1794 = vunpack.c.l.b16 %v1595
    %v1795 = vunpack.c.h.b16 %v1595
    %v1796 = vunpack.c.l.b16 %v1596
    %v1797 = vunpack.c.h.b16 %v1596
    %v1798 = vunpack.c.l.b16 %v1597
    %v1799 = vunpack.c.h.b16 %v1597
    %v1800 = vpack.c.b16 %v1676, %v1672
    %v1801 = vpack.c.b16 %v1677, %v1673
    %v1802 = vpack.c.b16 %v1678, %v1674
    %v1803 = vpack.c.b16 %v1679, %v1675
    %v1804 = vpack.c.b16 %v1684, %v1680
    %v1805 = vpack.c.b16 %v1685, %v1681
    %v1806 = vpack.c.b16 %v1686, %v1682
    %v1807 = vpack.c.b16 %v1687, %v1683
    %v1808 = vpack.c.b16 %v1692, %v1688
    %v1809 = vpack.c.b16 %v1693, %v1689
    %v1810 = vpack.c.b16 %v1694, %v1690
    %v1811 = vpack.c.b16 %v1695, %v1691
    %v1812 = vpack.c.b16 %v1700, %v1696
    %v1813 = vpack.c.b16 %v1701, %v1697
    %v1814 = vpack.c.b16 %v1702, %v1698
    %v1815 = vpack.c.b16 %v1703, %v1699
    %v1816 = vpack.c.b16 %v1708, %v1704
    %v1817 = vpack.c.b16 %v1709, %v1705
    %v1818 = vpack.c.b16 %v1710, %v1706
    %v1819 = vpack.c.b16 %v1711, %v1707
    %v1820 = vpack.c.b16 %v1716, %v1712
    %v1821 = vpack.c.b16 %v1717, %v1713
    %v1822 = vpack.c.b16 %v1718, %v1714
    %v1823 = vpack.c.b16 %v1719, %v1715
    %v1824 = vpack.c.b16 %v1724, %v1720
    %v1825 = vpack.c.b16 %v1725, %v1721
    %v1826 = vpack.c.b16 %v1726, %v1722
    %v1827 = vpack.c.b16 %v1727, %v1723
    %v1828 = vpack.c.b16 %v1732, %v1728
    %v1829 = vpack.c.b16 %v1733, %v1729
    %v1830 = vpack.c.b16 %v1734, %v1730
    %v1831 = vpack.c.b16 %v1735, %v1731
    %v1832 = vpack.c.b16 %v1740, %v1736
    %v1833 = vpack.c.b16 %v1741, %v1737
    %v1834 = vpack.c.b16 %v1742, %v1738
    %v1835 = vpack.c.b16 %v1743, %v1739
    %v1836 = vpack.c.b16 %v1748, %v1744
    %v1837 = vpack.c.b16 %v1749, %v1745
    %v1838 = vpack.c.b16 %v1750, %v1746
    %v1839 = vpack.c.b16 %v1751, %v1747
    %v1840 = vpack.c.b16 %v1756, %v1752
    %v1841 = vpack.c.b16 %v1757, %v1753
    %v1842 = vpack.c.b16 %v1758, %v1754
    %v1843 = vpack.c.b16 %v1759, %v1755
    %v1844 = vpack.c.b16 %v1764, %v1760
    %v1845 = vpack.c.b16 %v1765, %v1761
    %v1846 = vpack.c.b16 %v1766, %v1762
    %v1847 = vpack.c.b16 %v1767, %v1763
    %v1848 = vpack.c.b16 %v1772, %v1768
    %v1849 = vpack.c.b16 %v1773, %v1769
    %v1850 = vpack.c.b16 %v1774, %v1770
    %v1851 = vpack.c.b16 %v1775, %v1771
    %v1852 = vpack.c.b16 %v1780, %v1776
    %v1853 = vpack.c.b16 %v1781, %v1777
    %v1854 = vpack.c.b16 %v1782, %v1778
    %v1855 = vpack.c.b16 %v1783, %v1779
    %v1856 = vpack.c.b16 %v1788, %v1784
    %v1857 = vpack.c.b16 %v1789, %v1785
    %v1858 = vpack.c.b16 %v1790, %v1786
    %v1859 = vpack.c.b16 %v1791, %v1787
    %v1860 = vpack.c.b16 %v1796, %v1792
    %v1861 = vpack.c.b16 %v1797, %v1793
    %v1862 = vpack.c.b16 %v1798, %v1794
    %v1863 = vpack.c.b16 %v1799, %v1795
    %1928 = vmatpush.bf16.msra.mxu0 %v1828
    %1929 = vmatpush.bf16.msra.mxu0 %v1824
    %1930 = vmatpush.bf16.msra.mxu0 %v1820
    %1931 = vmatpush.bf16.msra.mxu0 %v1816
    %1932 = vmatpush.bf16.msra.mxu0 %v1812
    %1933 = vmatpush.bf16.msra.mxu0 %v1808
    %1934 = vmatpush.bf16.msra.mxu0 %v1804
    %1935 = vmatpush.bf16.msra.mxu0 %v1800
    %1936 = vmatmul.bf16.gmra.mxu0 %v1532
    %v1937 = vpop.f32.mrf.mxu0
    %v1938 = vadd.f32 %v1600, %v1937
    %v1939 = vpop.f32.mrf.mxu0
    %1940 = vdwg.mxu0
    %1941 = vmatpush.bf16.msra.mxu0 %v1860
    %1942 = vmatpush.bf16.msra.mxu0 %v1856
    %1943 = vmatpush.bf16.msra.mxu0 %v1852
    %1944 = vmatpush.bf16.msra.mxu0 %v1848
    %1945 = vmatpush.bf16.msra.mxu0 %v1844
    %1946 = vmatpush.bf16.msra.mxu0 %v1840
    %1947 = vmatpush.bf16.msra.mxu0 %v1836
    %1948 = vmatpush.bf16.msra.mxu0 %v1832
    %1949 = vmatmul.bf16.gmra.mxu0 %v1533
    %v1950 = vpop.f32.mrf.mxu0
    %v1951 = vadd.f32 %v1938, %v1950
    %v1952 = vpop.f32.mrf.mxu0
    %1953 = vdwg.mxu0
    %1954 = vmatpush.bf16.msra.mxu0 %v1829
    %1955 = vmatpush.bf16.msra.mxu0 %v1825
    %1956 = vmatpush.bf16.msra.mxu0 %v1821
    %1957 = vmatpush.bf16.msra.mxu0 %v1817
    %1958 = vmatpush.bf16.msra.mxu0 %v1813
    %1959 = vmatpush.bf16.msra.mxu0 %v1809
    %1960 = vmatpush.bf16.msra.mxu0 %v1805
    %1961 = vmatpush.bf16.msra.mxu0 %v1801
    %1962 = vmatmul.bf16.gmra.mxu0 %v1532
    %v1963 = vpop.f32.mrf.mxu0
    %v1964 = vadd.f32 %v1601, %v1963
    %v1965 = vpop.f32.mrf.mxu0
    %1966 = vdwg.mxu0
    %1967 = vmatpush.bf16.msra.mxu0 %v1861
    %1968 = vmatpush.bf16.msra.mxu0 %v1857
    %1969 = vmatpush.bf16.msra.mxu0 %v1853
    %1970 = vmatpush.bf16.msra.mxu0 %v1849
    %1971 = vmatpush.bf16.msra.mxu0 %v1845
    %1972 = vmatpush.bf16.msra.mxu0 %v1841
    %1973 = vmatpush.bf16.msra.mxu0 %v1837
    %1974 = vmatpush.bf16.msra.mxu0 %v1833
    %1975 = vmatmul.bf16.gmra.mxu0 %v1533
    %v1976 = vpop.f32.mrf.mxu0
    %v1977 = vadd.f32 %v1964, %v1976
    %v1978 = vpop.f32.mrf.mxu0
    %1979 = vdwg.mxu0
    %1980 = vmatpush.bf16.msra.mxu0 %v1830
    %1981 = vmatpush.bf16.msra.mxu0 %v1826
    %1982 = vmatpush.bf16.msra.mxu0 %v1822
    %1983 = vmatpush.bf16.msra.mxu0 %v1818
    %1984 = vmatpush.bf16.msra.mxu0 %v1814
    %1985 = vmatpush.bf16.msra.mxu0 %v1810
    %1986 = vmatpush.bf16.msra.mxu0 %v1806
    %1987 = vmatpush.bf16.msra.mxu0 %v1802
    %1988 = vmatmul.bf16.gmra.mxu0 %v1532
    %v1989 = vpop.f32.mrf.mxu0
    %v1990 = vadd.f32 %v1602, %v1989
    %v1991 = vpop.f32.mrf.mxu0
    %1992 = vdwg.mxu0
    %1993 = vmatpush.bf16.msra.mxu0 %v1862
    %1994 = vmatpush.bf16.msra.mxu0 %v1858
    %1995 = vmatpush.bf16.msra.mxu0 %v1854
    %1996 = vmatpush.bf16.msra.mxu0 %v1850
    %1997 = vmatpush.bf16.msra.mxu0 %v1846
    %1998 = vmatpush.bf16.msra.mxu0 %v1842
    %1999 = vmatpush.bf16.msra.mxu0 %v1838
    %2000 = vmatpush.bf16.msra.mxu0 %v1834
    %2001 = vmatmul.bf16.gmra.mxu0 %v1533
    %v2002 = vpop.f32.mrf.mxu0
    %v2003 = vadd.f32 %v1990, %v2002
    %v2004 = vpop.f32.mrf.mxu0
    %2005 = vdwg.mxu0
    %2006 = vmatpush.bf16.msra.mxu0 %v1831
    %2007 = vmatpush.bf16.msra.mxu0 %v1827
    %2008 = vmatpush.bf16.msra.mxu0 %v1823
    %2009 = vmatpush.bf16.msra.mxu0 %v1819
    %2010 = vmatpush.bf16.msra.mxu0 %v1815
    %2011 = vmatpush.bf16.msra.mxu0 %v1811
    %2012 = vmatpush.bf16.msra.mxu0 %v1807
    %2013 = vmatpush.bf16.msra.mxu0 %v1803
    %2014 = vmatmul.bf16.gmra.mxu0 %v1532
    %v2015 = vpop.f32.mrf.mxu0
    %v2016 = vadd.f32 %v1603, %v2015
    %v2017 = vpop.f32.mrf.mxu0
    %2018 = vdwg.mxu0
    %2019 = vmatpush.bf16.msra.mxu0 %v1863
    %2020 = vmatpush.bf16.msra.mxu0 %v1859
    %2021 = vmatpush.bf16.msra.mxu0 %v1855
    %2022 = vmatpush.bf16.msra.mxu0 %v1851
    %2023 = vmatpush.bf16.msra.mxu0 %v1847
    %2024 = vmatpush.bf16.msra.mxu0 %v1843
    %2025 = vmatpush.bf16.msra.mxu0 %v1839
    %2026 = vmatpush.bf16.msra.mxu0 %v1835
    %2027 = vmatmul.bf16.gmra.mxu0 %v1533
    %v2028 = vpop.f32.mrf.mxu0
    %v2029 = vadd.f32 %v2016, %v2028
    %v2030 = vpop.f32.mrf.mxu0
    %2031 = vdwg.mxu0
    %v2032 = vtanh.pop %v1951
    %v2033 = vtanh.pop %v1977
    %v2034 = vtanh.pop %v2003
    %v2035 = vtanh.pop %v2029
    %v2036 = vld [vmem:[#allocation14] sm:$0xff]
    %v2037 = vld [vmem:[#allocation14 + $0x8] sm:$0xff]
    %v2038 = vmul.f32 %v2036, %v2032
    %v2039 = vmul.f32 %v2037, %v2033
    %2040 = vst [vmem:[#allocation15] sm:$0xff] %v2038
    %2041 = vst [vmem:[#allocation15 + $0x8] sm:$0xff] %v2039
    %v2042 = vmul.f32 %v2036, %v2034
    %v2043 = vmul.f32 %v2037, %v2035
    %2044 = vst [vmem:[#allocation16] sm:$0xff] %v2042
    %2045 = vst [vmem:[#allocation16 + $0x8] sm:$0xff] %v2043
    // Predicated region
    $region62: #{tpu_custom_call.1} parent=1 // pred_check
      _
    $region63: #{tpu_custom_call.1} parent=1 // pred_check_branch
      %2047 = sbr.rel (0) target = $region65
    $region64: #{tpu_custom_call.1} parent=1 // pred_region
      %2049 = vsyncadd [#allocation5], 0
      %s2051 = sshll.u32 [#allocation15], 4
      %s2052 = int_to_ptr.vmem [resolvable:$true] %s2051
      %s2053 = sshll.u32 %s8, 4
      %s2054 = int_to_ptr.hbm [resolvable:$true] %s2053
      %2056 = dma.vmem_to_hbm [thread:$0]  %s2052, 256, %s2054, [#allocation5]
    $region65: #{tpu_custom_call.1} parent=1 // pred_fallthru
      _
    // Predicated region
    $region66: #{tpu_custom_call.1} parent=1 // pred_check
      _
    $region67: #{tpu_custom_call.1} parent=1 // pred_check_branch
      %2058 = sbr.rel (0) target = $region69
    $region68: #{tpu_custom_call.1} parent=1 // pred_region
      %2060 = vsyncadd [#allocation17], 0
      %s2062 = sshll.u32 [#allocation16], 4
      %s2063 = int_to_ptr.vmem [resolvable:$true] %s2062
      %s2064 = sshll.u32 %s9, 4
      %s2065 = int_to_ptr.hbm [resolvable:$true] %s2064
      %2067 = dma.vmem_to_hbm [thread:$0]  %s2063, 256, %s2065, [#allocation17]
    $region69: #{tpu_custom_call.1} parent=1 // pred_fallthru
      _
    // Predicated region
    $region70: #{tpu_custom_call.1} parent=1 // pred_check
      _
    $region71: #{tpu_custom_call.1} parent=1 // pred_check_branch
      %2069 = sbr.rel (0) target = $region73
    $region72: #{tpu_custom_call.1} parent=1 // pred_region
      %2071 = dma.done [#allocation5], 256
    $region73: #{tpu_custom_call.1} parent=1 // pred_fallthru
      _
    // Predicated region
    $region74: #{tpu_custom_call.1} parent=1 // pred_check
      _
    $region75: #{tpu_custom_call.1} parent=1 // pred_check_branch
      %2073 = sbr.rel (0) target = $region77
    $region76: #{tpu_custom_call.1} parent=1 // pred_region
      %2075 = dma.done [#allocation17], 256
    $region77: #{tpu_custom_call.1} parent=1 // pred_fallthru
      _
    %2076 = vsyncpa [#allocation4], 1
    %2077 = vsyncpa [#allocation7], 1
    %2078 = vsyncpa [#allocation10], 1
    %2079 = vsyncpa [#allocation13], 1
    %2080 = vsyncpa [#allocation5], 1
    %2081 = vsyncpa [#allocation17], 1

</llo_original>
